<compile_context>
chip_gen: v7x
topology: tpu7x:2x2x1
jax: 0.10.0
libtpu: 0.0.40
codegen_flags: <defaults>
</compile_context>

<pallas_src>
import jax
import jax.numpy as jnp
from jax.experimental import pallas as pl
from jax.experimental.pallas import tpu as pltpu

_EPS = 1e-6  # nn.LayerNorm(eps=1e-6, elementwise_affine=False)

# dot_general dimension numbers for 2-D operands (as used by the TPU flash ops).
_TN = (((0,), (0,)), ((), ()))   # contract dim 0 of both operands
_NT = (((1,), (1,)), ((), ()))   # A @ B^T


def _layernorm(v):
    mu = jnp.mean(v, axis=-1, keepdims=True)
    var = jnp.mean(jnp.square(v - mu), axis=-1, keepdims=True)
    return (v - mu) * jax.lax.rsqrt(var + _EPS)


def _transformer_layer_kernel(x_ref, c_ref,
                              w_ada_ref, b_ada_ref,
                              w_qkvt_ref, b_qkvt_ref,
                              w_outh_ref, b_out_ref,
                              w_ff1_ref, b_ff1_ref,
                              w_ff2_ref, b_ff2_ref,
                              o_ref):
    gs, E = x_ref.shape[1], x_ref.shape[2]      # group_size, embed_dim
    H, D, _ = w_outh_ref.shape                  # num_heads, head_dim
    mx = w_qkvt_ref.dtype                       # MXU input dtype (bf16)
    inv_sqrt_d = 1.0 / (D ** 0.5)

    x = x_ref[0]                                # (gs, E) f32
    c = c_ref[0]                                # (gs, E) f32

    # ---- adaLN modulation: Linear(SiLU(c)) -> six (gs, E) chunks ------------
    # Per-chunk weights live on the leading dim of w_ada (6, E, E); no lane
    # slicing of a (gs, 6E) output.
    c_silu = (c * jax.nn.sigmoid(c)).astype(mx)

    def mod_chunk(j):
        return (jnp.dot(c_silu, w_ada_ref[j], preferred_element_type=jnp.float32)
                + b_ada_ref[j])

    shift_msa, scale_msa, gate_msa = mod_chunk(0), mod_chunk(1), mod_chunk(2)
    shift_mlp, scale_mlp, gate_mlp = mod_chunk(3), mod_chunk(4), mod_chunk(5)

    # ---- attention branch ----------------------------------------------------
    xm = _layernorm(x) * (1.0 + scale_msa) + shift_msa       # modulate(norm1(x))
    xm_t = xm.T.astype(mx)                                   # (E, gs)

    # q/k/v produced directly in transposed (E_out, gs) layout: W^T @ x^T,
    # so the per-head split below is a free sublane (leading-dim) slice.
    def proj_t(j):
        return (jnp.dot(w_qkvt_ref[j], xm_t, preferred_element_type=jnp.float32)
                + b_qkvt_ref[j])                             # (E, gs) f32

    q_t = (proj_t(0) * inv_sqrt_d).astype(mx)   # fold 1/sqrt(D) into q
    k_t = proj_t(1).astype(mx)
    v_t = proj_t(2).astype(mx)

    attn = jnp.zeros((gs, E), jnp.float32)
    for h in range(H):                          # statically unrolled, H is small
        sl = slice(h * D, (h + 1) * D)          # leading-dim slice: no lane masks
        q_h, k_h, v_h = q_t[sl], k_t[sl], v_t[sl]            # (D, gs) each
        s = jax.lax.dot_general(q_h, k_h, _TN,
                                preferred_element_type=jnp.float32)  # (gs, gs)
        s = s - jnp.max(s, axis=-1, keepdims=True)
        e = jnp.exp(s)
        p = e / jnp.sum(e, axis=-1, keepdims=True)           # softmax over group
        o_h = jax.lax.dot_general(p.astype(mx), v_h, _NT,
                                  preferred_element_type=jnp.float32)  # (gs, D)
        # Fold the head back through its slice of the out-projection instead of
        # a lane-wise concatenate:  attn += o_h @ W_out[h*D:(h+1)*D, :].
        attn = attn + jnp.dot(o_h.astype(mx), w_outh_ref[h],
                              preferred_element_type=jnp.float32)
    attn = attn + b_out_ref[...]

    x = x + gate_msa * attn
    x = _layernorm(x)                           # x = norm1(x)   (per the spec)

    # ---- feed-forward branch --------------------------------------------------
    xm2 = _layernorm(x) * (1.0 + scale_mlp) + shift_mlp      # modulate(norm2(x))
    h1 = jnp.dot(xm2.astype(mx), w_ff1_ref[...],
                 preferred_element_type=jnp.float32) + b_ff1_ref[...]
    h1 = jnp.maximum(h1, 0.0)                                # ReLU
    ff = jnp.dot(h1.astype(mx), w_ff2_ref[...],
                 preferred_element_type=jnp.float32) + b_ff2_ref[...]

    x = x + gate_mlp * ff
    x = _layernorm(x)                           # x = norm2(x)   (per the spec)

    o_ref[0] = x.astype(o_ref.dtype)


def transformer_layer_pallas(x, c, params, *, num_heads, num_groups):
    B, S, E = x.shape
    assert c.shape == (B, S, E), c.shape
    H, G = num_heads, num_groups
    assert E % H == 0, "embed_dim must be divisible by num_heads"
    assert S % G == 0, "seq_len must be divisible by num_groups"
    gs = S // G
    # Second-minor dim of the (1, gs, E) tile must be a multiple of 8 (or full).
    assert gs == S or gs % 8 == 0, "group_size must be a multiple of 8 (or num_groups == 1)"
    F = params['w_ff1'].shape[1]

    weights = (params['w_ada'], params['b_ada'],
               params['w_qkv_t'], params['b_qkv_t'],
               params['w_out_h'], params['b_out'],
               params['w_ff1'], params['b_ff1'],
               params['w_ff2'], params['b_ff2'])

    def tile_spec():
        return pl.BlockSpec((1, gs, E), lambda b, g: (b, g, 0))

    def const_spec(arr):   # whole (small) array resident in VMEM, block fixed
        zeros = (0,) * arr.ndim
        return pl.BlockSpec(arr.shape, lambda b, g, _z=zeros: _z)

    in_specs = [tile_spec(), tile_spec()] + [const_spec(w) for w in weights]

    # Advisory cost estimate for XLA scheduling around the custom call.
    flops = B * S * (2 * E * E * (6 + 3 + 1) + 4 * gs * E + 4 * E * F)
    transcendentals = B * S * (E + H * gs)
    bytes_accessed = 3 * B * S * E * 4 + sum(
        int(w.size) * w.dtype.itemsize for w in weights)

    return pl.pallas_call(
        _transformer_layer_kernel,
        out_shape=jax.ShapeDtypeStruct((B, S, E), x.dtype),
        grid=(B, G),
        in_specs=in_specs,
        out_specs=tile_spec(),
        compiler_params=pltpu.CompilerParams(
            dimension_semantics=("parallel", "parallel"),
            vmem_limit_bytes=32 * 1024 * 1024),
        cost_estimate=pl.CostEstimate(
            flops=int(flops),
            transcendentals=int(transcendentals),
            bytes_accessed=int(bytes_accessed)),
    )(x, c, *weights)


def init_layer_params(key, embed_dim, *, num_heads, feedforward_dim,
                      param_dtype=jnp.bfloat16):
    """Kernel-friendly parameter layout.

    Mapping from the PyTorch module (nn.Linear stores W as (out, in), y = x W^T + b):
      w_ada[j]   = adaLN_modulation[1].weight[j*E:(j+1)*E, :].T      -> (in, out) per chunk
      b_ada[j]   = adaLN_modulation[1].bias[j*E:(j+1)*E][None, :]
      w_qkv_t[j] = qkv_proj.weight[j*E:(j+1)*E, :]                   -> kept as (out, in)
      b_qkv_t[j] = qkv_proj.bias[j*E:(j+1)*E][:, None]
      w_out_h[h] = out_proj.weight.T[h*D:(h+1)*D, :]                 -> (in, out) per head
      b_out      = out_proj.bias[None, :]
      w_ff1/w_ff2 = feedforward Linear weights transposed to (in, out)
    Weights are stored bf16 (MXU-native on v6e/v7x, halves DMA/VMEM); biases f32.
    """
    E, H, F = embed_dim, num_heads, feedforward_dim
    D = E // H
    ks = jax.random.split(key, 10)

    def w(k, shape, scale=0.05):
        return (jax.random.normal(k, shape, jnp.float32) * scale).astype(param_dtype)

    def b(k, shape, scale=0.05):
        return jax.random.normal(k, shape, jnp.float32) * scale

    return {
        'w_ada':   w(ks[0], (6, E, E)),
        'b_ada':   b(ks[1], (6, 1, E)),
        'w_qkv_t': w(ks[2], (3, E, E)),
        'b_qkv_t': b(ks[3], (3, E, 1)),
        'w_out_h': w(ks[4], (H, D, E)),
        'b_out':   b(ks[5], (1, E)),
        'w_ff1':   w(ks[6], (E, F)),
        'b_ff1':   b(ks[7], (1, F)),
        'w_ff2':   w(ks[8], (F, E)),
        'b_ff2':   b(ks[9], (1, E)),
    }


def transformer_layer_reference(x, c, params, *, num_heads, num_groups):
    """Pure-JAX reference of TransformerLayer.forward with the same
    bf16-input / f32-accumulate matmul precision as the kernel."""
    B, S, E = x.shape
    H, G = num_heads, num_groups
    D = E // H
    gs = S // G
    f32 = jnp.float32
    mxd = params['w_qkv_t'].dtype

    def ln(v):
        mu = jnp.mean(v, axis=-1, keepdims=True)
        var = jnp.mean(jnp.square(v - mu), axis=-1, keepdims=True)
        return (v - mu) * jax.lax.rsqrt(var + _EPS)

    def mm(a, w):
        return jnp.dot(a.astype(w.dtype), w, preferred_element_type=f32)

    c_silu = c * jax.nn.sigmoid(c)
    mods = [mm(c_silu, params['w_ada'][j]) + params['b_ada'][j] for j in range(6)]
    shift_msa, scale_msa, gate_msa, shift_mlp, scale_mlp, gate_mlp = mods

    xm = ln(x) * (1.0 + scale_msa) + shift_msa
    qkv_w = jnp.swapaxes(params['w_qkv_t'], 1, 2)     # back to (3, in, out)
    qkv_b = params['b_qkv_t'][:, :, 0]                # (3, E)
    q = (mm(xm, qkv_w[0]) + qkv_b[0]) * (1.0 / D ** 0.5)
    k = mm(xm, qkv_w[1]) + qkv_b[1]
    v = mm(xm, qkv_w[2]) + qkv_b[2]

    def grp(t):  # (B, S, E) -> (B, G, gs, H, D)
        return t.reshape(B, G, gs, H, D)

    s = jnp.einsum('bgqhd,bgkhd->bghqk', grp(q).astype(mxd), grp(k).astype(mxd),
                   preferred_element_type=f32)
    s = s - jnp.max(s, axis=-1, keepdims=True)
    p = jnp.exp(s)
    p = p / jnp.sum(p, axis=-1, keepdims=True)
    o = jnp.einsum('bghqk,bgkhd->bgqhd', p.astype(mxd), grp(v).astype(mxd),
                   preferred_element_type=f32).reshape(B, S, E)
    attn = mm(o, params['w_out_h'].reshape(E, E)) + params['b_out'][0]

    x = x + gate_msa * attn
    x = ln(x)

    xm2 = ln(x) * (1.0 + scale_mlp) + shift_mlp
    h1 = jnp.maximum(mm(xm2, params['w_ff1']) + params['b_ff1'][0], 0.0)
    ff = mm(h1, params['w_ff2']) + params['b_ff2'][0]

    x = x + gate_mlp * ff
    x = ln(x)
    return x


if __name__ == "__main__":
    # Small shapes consistent with the module: embed divisible by num_heads,
    # seq divisible by num_groups, group_size a multiple of 8.
    B, S, E = 2, 16, 32          # batch, seq (num_nodes), embed (channels)
    H, G, F = 4, 2, 64           # num_heads, num_groups, feedforward_dim

    key = jax.random.PRNGKey(0)
    kx, kc, kp = jax.random.split(key, 3)
    x = jax.random.normal(kx, (B, S, E), jnp.float32)
    c = jax.random.normal(kc, (B, S, E), jnp.float32)   # conditioning input
    params = init_layer_params(kp, E, num_heads=H, feedforward_dim=F)

    out = transformer_layer_pallas(x, c, params, num_heads=H, num_groups=G)
    out = jax.block_until_ready(out)

    assert out.shape == (B, S, E), out.shape
    assert bool(jnp.all(jnp.isfinite(out)))

    ref = transformer_layer_reference(x, c, params, num_heads=H, num_groups=G)
    err = float(jnp.max(jnp.abs(out - ref)))
    assert err < 2e-2, f"kernel/reference mismatch: max abs err {err}"
    print("KERNEL_OK")
</pallas_src>

<mosaic_0001>
module attributes {stable_mosaic.version = 11 : i64} {
  func.func @_transformer_layer_kernel(%arg0: i32, %arg1: i32, %arg2: memref<1x8x32xf32, #tpu.memory_space<vmem>>, %arg3: memref<1x8x32xf32, #tpu.memory_space<vmem>>, %arg4: memref<6x32x32xbf16, #tpu.memory_space<vmem>>, %arg5: memref<6x1x32xf32, #tpu.memory_space<vmem>>, %arg6: memref<3x32x32xbf16, #tpu.memory_space<vmem>>, %arg7: memref<3x32x1xf32, #tpu.memory_space<vmem>>, %arg8: memref<4x8x32xbf16, #tpu.memory_space<vmem>>, %arg9: memref<1x32xf32, #tpu.memory_space<vmem>>, %arg10: memref<32x64xbf16, #tpu.memory_space<vmem>>, %arg11: memref<1x64xf32, #tpu.memory_space<vmem>>, %arg12: memref<64x32xbf16, #tpu.memory_space<vmem>>, %arg13: memref<1x32xf32, #tpu.memory_space<vmem>>, %arg14: memref<1x8x32xf32, #tpu.memory_space<vmem>>) attributes {dimension_semantics = [#tpu.dimension_semantics<parallel>, #tpu.dimension_semantics<parallel>], iteration_bounds = array<i64: 2, 2>, scalar_prefetch = 0 : i64, scratch_operands = 0 : i64, tpu.core_type = #tpu.core_type<tc>, window_params = [{transform_indices = @transform_0, window_bounds = array<i64: 1, 8, 32>}, {transform_indices = @transform_1, window_bounds = array<i64: 1, 8, 32>}, {pipeline_mode = #tpu.pipeline_mode<synchronous>, transform_indices = @transform_2, window_bounds = array<i64: 6, 32, 32>}, {pipeline_mode = #tpu.pipeline_mode<synchronous>, transform_indices = @transform_3, window_bounds = array<i64: 6, 1, 32>}, {pipeline_mode = #tpu.pipeline_mode<synchronous>, transform_indices = @transform_4, window_bounds = array<i64: 3, 32, 32>}, {pipeline_mode = #tpu.pipeline_mode<synchronous>, transform_indices = @transform_5, window_bounds = array<i64: 3, 32, 1>}, {pipeline_mode = #tpu.pipeline_mode<synchronous>, transform_indices = @transform_6, window_bounds = array<i64: 4, 8, 32>}, {pipeline_mode = #tpu.pipeline_mode<synchronous>, transform_indices = @transform_7, window_bounds = array<i64: 1, 32>}, {pipeline_mode = #tpu.pipeline_mode<synchronous>, transform_indices = @transform_8, window_bounds = array<i64: 32, 64>}, {pipeline_mode = #tpu.pipeline_mode<synchronous>, transform_indices = @transform_9, window_bounds = array<i64: 1, 64>}, {pipeline_mode = #tpu.pipeline_mode<synchronous>, transform_indices = @transform_10, window_bounds = array<i64: 64, 32>}, {pipeline_mode = #tpu.pipeline_mode<synchronous>, transform_indices = @transform_11, window_bounds = array<i64: 1, 32>}, {transform_indices = @transform_12, window_bounds = array<i64: 1, 8, 32>}]} {
    %c0 = arith.constant 0 : index
    %c0_0 = arith.constant 0 : index
    %c0_1 = arith.constant 0 : index
    %0 = vector.load %arg2[%c0, %c0_0, %c0_1] : memref<1x8x32xf32, #tpu.memory_space<vmem>>, vector<1x8x32xf32>
    %1 = vector.shape_cast %0 : vector<1x8x32xf32> to vector<8x32xf32>
    %c0_2 = arith.constant 0 : index
    %c0_3 = arith.constant 0 : index
    %c0_4 = arith.constant 0 : index
    %2 = vector.load %arg3[%c0_2, %c0_3, %c0_4] : memref<1x8x32xf32, #tpu.memory_space<vmem>>, vector<1x8x32xf32>
    %3 = vector.shape_cast %2 : vector<1x8x32xf32> to vector<8x32xf32>
    %4 = arith.negf %3 : vector<8x32xf32>
    %5 = math.exp %4 : vector<8x32xf32>
    %cst = arith.constant 1.000000e+00 : f32
    %6 = vector.broadcast %cst : f32 to vector<8x32xf32>
    %7 = arith.addf %6, %5 : vector<8x32xf32>
    %8 = arith.divf %6, %7 : vector<8x32xf32>
    %9 = arith.mulf %3, %8 : vector<8x32xf32>
    %10 = arith.truncf %9 : vector<8x32xf32> to vector<8x32xbf16>
    %c0_5 = arith.constant 0 : index
    %c0_6 = arith.constant 0 : index
    %c0_7 = arith.constant 0 : index
    %11 = vector.load %arg4[%c0_5, %c0_6, %c0_7] : memref<6x32x32xbf16, #tpu.memory_space<vmem>>, vector<1x32x32xbf16>
    %12 = vector.shape_cast %11 : vector<1x32x32xbf16> to vector<32x32xbf16>
    %cst_8 = arith.constant dense<0.000000e+00> : vector<8x32xf32>
    %13 = tpu.matmul %10, %12, %cst_8 {dimension_numbers = #tpu.dot_dimension_numbers<[1], [0], [0], [1], [0, 0, 1, 1], [], []>} : vector<8x32xbf16>, vector<32x32xbf16>, vector<8x32xf32> -> vector<8x32xf32>
    %c0_9 = arith.constant 0 : index
    %c0_10 = arith.constant 0 : index
    %c0_11 = arith.constant 0 : index
    %14 = vector.load %arg5[%c0_9, %c0_10, %c0_11] : memref<6x1x32xf32, #tpu.memory_space<vmem>>, vector<1x1x32xf32>
    %15 = vector.shape_cast %14 : vector<1x1x32xf32> to vector<1x32xf32>
    %16 = vector.broadcast %15 : vector<1x32xf32> to vector<8x32xf32>
    %17 = arith.addf %13, %16 : vector<8x32xf32>
    %c1 = arith.constant 1 : index
    %c0_12 = arith.constant 0 : index
    %c0_13 = arith.constant 0 : index
    %18 = vector.load %arg4[%c1, %c0_12, %c0_13] : memref<6x32x32xbf16, #tpu.memory_space<vmem>>, vector<1x32x32xbf16>
    %19 = vector.shape_cast %18 : vector<1x32x32xbf16> to vector<32x32xbf16>
    %cst_14 = arith.constant dense<0.000000e+00> : vector<8x32xf32>
    %20 = tpu.matmul %10, %19, %cst_14 {dimension_numbers = #tpu.dot_dimension_numbers<[1], [0], [0], [1], [0, 0, 1, 1], [], []>} : vector<8x32xbf16>, vector<32x32xbf16>, vector<8x32xf32> -> vector<8x32xf32>
    %c1_15 = arith.constant 1 : index
    %c0_16 = arith.constant 0 : index
    %c0_17 = arith.constant 0 : index
    %21 = vector.load %arg5[%c1_15, %c0_16, %c0_17] : memref<6x1x32xf32, #tpu.memory_space<vmem>>, vector<1x1x32xf32>
    %22 = vector.shape_cast %21 : vector<1x1x32xf32> to vector<1x32xf32>
    %23 = vector.broadcast %22 : vector<1x32xf32> to vector<8x32xf32>
    %24 = arith.addf %20, %23 : vector<8x32xf32>
    %c2 = arith.constant 2 : index
    %c0_18 = arith.constant 0 : index
    %c0_19 = arith.constant 0 : index
    %25 = vector.load %arg4[%c2, %c0_18, %c0_19] : memref<6x32x32xbf16, #tpu.memory_space<vmem>>, vector<1x32x32xbf16>
    %26 = vector.shape_cast %25 : vector<1x32x32xbf16> to vector<32x32xbf16>
    %cst_20 = arith.constant dense<0.000000e+00> : vector<8x32xf32>
    %27 = tpu.matmul %10, %26, %cst_20 {dimension_numbers = #tpu.dot_dimension_numbers<[1], [0], [0], [1], [0, 0, 1, 1], [], []>} : vector<8x32xbf16>, vector<32x32xbf16>, vector<8x32xf32> -> vector<8x32xf32>
    %c2_21 = arith.constant 2 : index
    %c0_22 = arith.constant 0 : index
    %c0_23 = arith.constant 0 : index
    %28 = vector.load %arg5[%c2_21, %c0_22, %c0_23] : memref<6x1x32xf32, #tpu.memory_space<vmem>>, vector<1x1x32xf32>
    %29 = vector.shape_cast %28 : vector<1x1x32xf32> to vector<1x32xf32>
    %30 = vector.broadcast %29 : vector<1x32xf32> to vector<8x32xf32>
    %31 = arith.addf %27, %30 : vector<8x32xf32>
    %c3 = arith.constant 3 : index
    %c0_24 = arith.constant 0 : index
    %c0_25 = arith.constant 0 : index
    %32 = vector.load %arg4[%c3, %c0_24, %c0_25] : memref<6x32x32xbf16, #tpu.memory_space<vmem>>, vector<1x32x32xbf16>
    %33 = vector.shape_cast %32 : vector<1x32x32xbf16> to vector<32x32xbf16>
    %cst_26 = arith.constant dense<0.000000e+00> : vector<8x32xf32>
    %34 = tpu.matmul %10, %33, %cst_26 {dimension_numbers = #tpu.dot_dimension_numbers<[1], [0], [0], [1], [0, 0, 1, 1], [], []>} : vector<8x32xbf16>, vector<32x32xbf16>, vector<8x32xf32> -> vector<8x32xf32>
    %c3_27 = arith.constant 3 : index
    %c0_28 = arith.constant 0 : index
    %c0_29 = arith.constant 0 : index
    %35 = vector.load %arg5[%c3_27, %c0_28, %c0_29] : memref<6x1x32xf32, #tpu.memory_space<vmem>>, vector<1x1x32xf32>
    %36 = vector.shape_cast %35 : vector<1x1x32xf32> to vector<1x32xf32>
    %37 = vector.broadcast %36 : vector<1x32xf32> to vector<8x32xf32>
    %38 = arith.addf %34, %37 : vector<8x32xf32>
    %c4 = arith.constant 4 : index
    %c0_30 = arith.constant 0 : index
    %c0_31 = arith.constant 0 : index
    %39 = vector.load %arg4[%c4, %c0_30, %c0_31] : memref<6x32x32xbf16, #tpu.memory_space<vmem>>, vector<1x32x32xbf16>
    %40 = vector.shape_cast %39 : vector<1x32x32xbf16> to vector<32x32xbf16>
    %cst_32 = arith.constant dense<0.000000e+00> : vector<8x32xf32>
    %41 = tpu.matmul %10, %40, %cst_32 {dimension_numbers = #tpu.dot_dimension_numbers<[1], [0], [0], [1], [0, 0, 1, 1], [], []>} : vector<8x32xbf16>, vector<32x32xbf16>, vector<8x32xf32> -> vector<8x32xf32>
    %c4_33 = arith.constant 4 : index
    %c0_34 = arith.constant 0 : index
    %c0_35 = arith.constant 0 : index
    %42 = vector.load %arg5[%c4_33, %c0_34, %c0_35] : memref<6x1x32xf32, #tpu.memory_space<vmem>>, vector<1x1x32xf32>
    %43 = vector.shape_cast %42 : vector<1x1x32xf32> to vector<1x32xf32>
    %44 = vector.broadcast %43 : vector<1x32xf32> to vector<8x32xf32>
    %45 = arith.addf %41, %44 : vector<8x32xf32>
    %c5 = arith.constant 5 : index
    %c0_36 = arith.constant 0 : index
    %c0_37 = arith.constant 0 : index
    %46 = vector.load %arg4[%c5, %c0_36, %c0_37] : memref<6x32x32xbf16, #tpu.memory_space<vmem>>, vector<1x32x32xbf16>
    %47 = vector.shape_cast %46 : vector<1x32x32xbf16> to vector<32x32xbf16>
    %cst_38 = arith.constant dense<0.000000e+00> : vector<8x32xf32>
    %48 = tpu.matmul %10, %47, %cst_38 {dimension_numbers = #tpu.dot_dimension_numbers<[1], [0], [0], [1], [0, 0, 1, 1], [], []>} : vector<8x32xbf16>, vector<32x32xbf16>, vector<8x32xf32> -> vector<8x32xf32>
    %c5_39 = arith.constant 5 : index
    %c0_40 = arith.constant 0 : index
    %c0_41 = arith.constant 0 : index
    %49 = vector.load %arg5[%c5_39, %c0_40, %c0_41] : memref<6x1x32xf32, #tpu.memory_space<vmem>>, vector<1x1x32xf32>
    %50 = vector.shape_cast %49 : vector<1x1x32xf32> to vector<1x32xf32>
    %51 = vector.broadcast %50 : vector<1x32xf32> to vector<8x32xf32>
    %52 = arith.addf %48, %51 : vector<8x32xf32>
    %cst_42 = arith.constant dense<0.000000e+00> : vector<8xf32>
    %53 = vector.multi_reduction <add>, %1, %cst_42 [1] : vector<8x32xf32> to vector<8xf32>
    %54 = vector.shape_cast %53 : vector<8xf32> to vector<8x1xf32>
    %cst_43 = arith.constant 3.200000e+01 : f32
    %55 = vector.broadcast %cst_43 : f32 to vector<8x1xf32>
    %56 = arith.divf %54, %55 : vector<8x1xf32>
    %57 = vector.broadcast %56 : vector<8x1xf32> to vector<8x32xf32>
    %58 = arith.subf %1, %57 : vector<8x32xf32>
    %59 = arith.mulf %58, %58 : vector<8x32xf32>
    %cst_44 = arith.constant dense<0.000000e+00> : vector<8xf32>
    %60 = vector.multi_reduction <add>, %59, %cst_44 [1] : vector<8x32xf32> to vector<8xf32>
    %61 = vector.shape_cast %60 : vector<8xf32> to vector<8x1xf32>
    %cst_45 = arith.constant 3.200000e+01 : f32
    %62 = vector.broadcast %cst_45 : f32 to vector<8x1xf32>
    %63 = arith.divf %61, %62 : vector<8x1xf32>
    %64 = vector.broadcast %56 : vector<8x1xf32> to vector<8x32xf32>
    %65 = arith.subf %1, %64 : vector<8x32xf32>
    %cst_46 = arith.constant 9.99999997E-7 : f32
    %66 = vector.broadcast %cst_46 : f32 to vector<8x1xf32>
    %67 = arith.addf %63, %66 : vector<8x1xf32>
    %68 = math.rsqrt %67 : vector<8x1xf32>
    %69 = vector.broadcast %68 : vector<8x1xf32> to vector<8x32xf32>
    %70 = arith.mulf %65, %69 : vector<8x32xf32>
    %cst_47 = arith.constant 1.000000e+00 : f32
    %71 = vector.broadcast %cst_47 : f32 to vector<8x32xf32>
    %72 = arith.addf %71, %24 : vector<8x32xf32>
    %73 = arith.mulf %70, %72 : vector<8x32xf32>
    %74 = arith.addf %73, %17 : vector<8x32xf32>
    %75 = tpu.transpose %74, [1, 0] : vector<8x32xf32> -> vector<32x8xf32>
    %76 = arith.truncf %75 : vector<32x8xf32> to vector<32x8xbf16>
    %c0_48 = arith.constant 0 : index
    %c0_49 = arith.constant 0 : index
    %c0_50 = arith.constant 0 : index
    %77 = vector.load %arg6[%c0_48, %c0_49, %c0_50] : memref<3x32x32xbf16, #tpu.memory_space<vmem>>, vector<1x32x32xbf16>
    %78 = vector.shape_cast %77 : vector<1x32x32xbf16> to vector<32x32xbf16>
    %cst_51 = arith.constant dense<0.000000e+00> : vector<32x8xf32>
    %79 = tpu.matmul %78, %76, %cst_51 {dimension_numbers = #tpu.dot_dimension_numbers<[1], [0], [0], [1], [0, 0, 1, 1], [], []>} : vector<32x32xbf16>, vector<32x8xbf16>, vector<32x8xf32> -> vector<32x8xf32>
    %c0_52 = arith.constant 0 : index
    %c0_53 = arith.constant 0 : index
    %c0_54 = arith.constant 0 : index
    %80 = vector.load %arg7[%c0_52, %c0_53, %c0_54] : memref<3x32x1xf32, #tpu.memory_space<vmem>>, vector<1x32x1xf32>
    %81 = vector.shape_cast %80 : vector<1x32x1xf32> to vector<32x1xf32>
    %82 = vector.broadcast %81 : vector<32x1xf32> to vector<32x8xf32>
    %83 = arith.addf %79, %82 : vector<32x8xf32>
    %cst_55 = arith.constant 0.353553385 : f32
    %84 = vector.broadcast %cst_55 : f32 to vector<32x8xf32>
    %85 = arith.mulf %83, %84 : vector<32x8xf32>
    %86 = arith.truncf %85 : vector<32x8xf32> to vector<32x8xbf16>
    %c1_56 = arith.constant 1 : index
    %c0_57 = arith.constant 0 : index
    %c0_58 = arith.constant 0 : index
    %87 = vector.load %arg6[%c1_56, %c0_57, %c0_58] : memref<3x32x32xbf16, #tpu.memory_space<vmem>>, vector<1x32x32xbf16>
    %88 = vector.shape_cast %87 : vector<1x32x32xbf16> to vector<32x32xbf16>
    %cst_59 = arith.constant dense<0.000000e+00> : vector<32x8xf32>
    %89 = tpu.matmul %88, %76, %cst_59 {dimension_numbers = #tpu.dot_dimension_numbers<[1], [0], [0], [1], [0, 0, 1, 1], [], []>} : vector<32x32xbf16>, vector<32x8xbf16>, vector<32x8xf32> -> vector<32x8xf32>
    %c1_60 = arith.constant 1 : index
    %c0_61 = arith.constant 0 : index
    %c0_62 = arith.constant 0 : index
    %90 = vector.load %arg7[%c1_60, %c0_61, %c0_62] : memref<3x32x1xf32, #tpu.memory_space<vmem>>, vector<1x32x1xf32>
    %91 = vector.shape_cast %90 : vector<1x32x1xf32> to vector<32x1xf32>
    %92 = vector.broadcast %91 : vector<32x1xf32> to vector<32x8xf32>
    %93 = arith.addf %89, %92 : vector<32x8xf32>
    %94 = arith.truncf %93 : vector<32x8xf32> to vector<32x8xbf16>
    %c2_63 = arith.constant 2 : index
    %c0_64 = arith.constant 0 : index
    %c0_65 = arith.constant 0 : index
    %95 = vector.load %arg6[%c2_63, %c0_64, %c0_65] : memref<3x32x32xbf16, #tpu.memory_space<vmem>>, vector<1x32x32xbf16>
    %96 = vector.shape_cast %95 : vector<1x32x32xbf16> to vector<32x32xbf16>
    %cst_66 = arith.constant dense<0.000000e+00> : vector<32x8xf32>
    %97 = tpu.matmul %96, %76, %cst_66 {dimension_numbers = #tpu.dot_dimension_numbers<[1], [0], [0], [1], [0, 0, 1, 1], [], []>} : vector<32x32xbf16>, vector<32x8xbf16>, vector<32x8xf32> -> vector<32x8xf32>
    %c2_67 = arith.constant 2 : index
    %c0_68 = arith.constant 0 : index
    %c0_69 = arith.constant 0 : index
    %98 = vector.load %arg7[%c2_67, %c0_68, %c0_69] : memref<3x32x1xf32, #tpu.memory_space<vmem>>, vector<1x32x1xf32>
    %99 = vector.shape_cast %98 : vector<1x32x1xf32> to vector<32x1xf32>
    %100 = vector.broadcast %99 : vector<32x1xf32> to vector<32x8xf32>
    %101 = arith.addf %97, %100 : vector<32x8xf32>
    %102 = arith.truncf %101 : vector<32x8xf32> to vector<32x8xbf16>
    %cst_70 = arith.constant 0.000000e+00 : f32
    %103 = vector.broadcast %cst_70 : f32 to vector<8x32xf32>
    %104 = vector.extract_strided_slice %86 {offsets = [0, 0], sizes = [8, 8], strides = [1, 1]} : vector<32x8xbf16> to vector<8x8xbf16>
    %105 = vector.extract_strided_slice %94 {offsets = [0, 0], sizes = [8, 8], strides = [1, 1]} : vector<32x8xbf16> to vector<8x8xbf16>
    %106 = vector.extract_strided_slice %102 {offsets = [0, 0], sizes = [8, 8], strides = [1, 1]} : vector<32x8xbf16> to vector<8x8xbf16>
    %cst_71 = arith.constant dense<0.000000e+00> : vector<8x8xf32>
    %107 = tpu.matmul %104, %105, %cst_71 {dimension_numbers = #tpu.dot_dimension_numbers<[0], [0], [1], [1], [0, 1, 1, 1], [], []>} : vector<8x8xbf16>, vector<8x8xbf16>, vector<8x8xf32> -> vector<8x8xf32>
    %cst_72 = arith.constant dense<0xFF800000> : vector<8xf32>
    %108 = vector.multi_reduction <maximumf>, %107, %cst_72 [1] : vector<8x8xf32> to vector<8xf32>
    %109 = vector.shape_cast %108 : vector<8xf32> to vector<8x1xf32>
    %110 = vector.broadcast %109 : vector<8x1xf32> to vector<8x8xf32>
    %111 = arith.subf %107, %110 : vector<8x8xf32>
    %112 = math.exp %111 : vector<8x8xf32>
    %cst_73 = arith.constant dense<0.000000e+00> : vector<8xf32>
    %113 = vector.multi_reduction <add>, %112, %cst_73 [1] : vector<8x8xf32> to vector<8xf32>
    %114 = vector.shape_cast %113 : vector<8xf32> to vector<8x1xf32>
    %115 = vector.broadcast %114 : vector<8x1xf32> to vector<8x8xf32>
    %116 = arith.divf %112, %115 : vector<8x8xf32>
    %117 = arith.truncf %116 : vector<8x8xf32> to vector<8x8xbf16>
    %cst_74 = arith.constant dense<0.000000e+00> : vector<8x8xf32>
    %118 = tpu.matmul %117, %106, %cst_74 {dimension_numbers = #tpu.dot_dimension_numbers<[1], [1], [0], [0], [0, 0, 1, 0], [], []>} : vector<8x8xbf16>, vector<8x8xbf16>, vector<8x8xf32> -> vector<8x8xf32>
    %119 = arith.truncf %118 : vector<8x8xf32> to vector<8x8xbf16>
    %c0_75 = arith.constant 0 : index
    %c0_76 = arith.constant 0 : index
    %c0_77 = arith.constant 0 : index
    %120 = vector.load %arg8[%c0_75, %c0_76, %c0_77] : memref<4x8x32xbf16, #tpu.memory_space<vmem>>, vector<1x8x32xbf16>
    %121 = vector.shape_cast %120 : vector<1x8x32xbf16> to vector<8x32xbf16>
    %cst_78 = arith.constant dense<0.000000e+00> : vector<8x32xf32>
    %122 = tpu.matmul %119, %121, %cst_78 {dimension_numbers = #tpu.dot_dimension_numbers<[1], [0], [0], [1], [0, 0, 1, 1], [], []>} : vector<8x8xbf16>, vector<8x32xbf16>, vector<8x32xf32> -> vector<8x32xf32>
    %123 = arith.addf %103, %122 : vector<8x32xf32>
    %124 = vector.extract_strided_slice %86 {offsets = [8, 0], sizes = [8, 8], strides = [1, 1]} : vector<32x8xbf16> to vector<8x8xbf16>
    %125 = vector.extract_strided_slice %94 {offsets = [8, 0], sizes = [8, 8], strides = [1, 1]} : vector<32x8xbf16> to vector<8x8xbf16>
    %126 = vector.extract_strided_slice %102 {offsets = [8, 0], sizes = [8, 8], strides = [1, 1]} : vector<32x8xbf16> to vector<8x8xbf16>
    %cst_79 = arith.constant dense<0.000000e+00> : vector<8x8xf32>
    %127 = tpu.matmul %124, %125, %cst_79 {dimension_numbers = #tpu.dot_dimension_numbers<[0], [0], [1], [1], [0, 1, 1, 1], [], []>} : vector<8x8xbf16>, vector<8x8xbf16>, vector<8x8xf32> -> vector<8x8xf32>
    %cst_80 = arith.constant dense<0xFF800000> : vector<8xf32>
    %128 = vector.multi_reduction <maximumf>, %127, %cst_80 [1] : vector<8x8xf32> to vector<8xf32>
    %129 = vector.shape_cast %128 : vector<8xf32> to vector<8x1xf32>
    %130 = vector.broadcast %129 : vector<8x1xf32> to vector<8x8xf32>
    %131 = arith.subf %127, %130 : vector<8x8xf32>
    %132 = math.exp %131 : vector<8x8xf32>
    %cst_81 = arith.constant dense<0.000000e+00> : vector<8xf32>
    %133 = vector.multi_reduction <add>, %132, %cst_81 [1] : vector<8x8xf32> to vector<8xf32>
    %134 = vector.shape_cast %133 : vector<8xf32> to vector<8x1xf32>
    %135 = vector.broadcast %134 : vector<8x1xf32> to vector<8x8xf32>
    %136 = arith.divf %132, %135 : vector<8x8xf32>
    %137 = arith.truncf %136 : vector<8x8xf32> to vector<8x8xbf16>
    %cst_82 = arith.constant dense<0.000000e+00> : vector<8x8xf32>
    %138 = tpu.matmul %137, %126, %cst_82 {dimension_numbers = #tpu.dot_dimension_numbers<[1], [1], [0], [0], [0, 0, 1, 0], [], []>} : vector<8x8xbf16>, vector<8x8xbf16>, vector<8x8xf32> -> vector<8x8xf32>
    %139 = arith.truncf %138 : vector<8x8xf32> to vector<8x8xbf16>
    %c1_83 = arith.constant 1 : index
    %c0_84 = arith.constant 0 : index
    %c0_85 = arith.constant 0 : index
    %140 = vector.load %arg8[%c1_83, %c0_84, %c0_85] : memref<4x8x32xbf16, #tpu.memory_space<vmem>>, vector<1x8x32xbf16>
    %141 = vector.shape_cast %140 : vector<1x8x32xbf16> to vector<8x32xbf16>
    %cst_86 = arith.constant dense<0.000000e+00> : vector<8x32xf32>
    %142 = tpu.matmul %139, %141, %cst_86 {dimension_numbers = #tpu.dot_dimension_numbers<[1], [0], [0], [1], [0, 0, 1, 1], [], []>} : vector<8x8xbf16>, vector<8x32xbf16>, vector<8x32xf32> -> vector<8x32xf32>
    %143 = arith.addf %123, %142 : vector<8x32xf32>
    %144 = vector.extract_strided_slice %86 {offsets = [16, 0], sizes = [8, 8], strides = [1, 1]} : vector<32x8xbf16> to vector<8x8xbf16>
    %145 = vector.extract_strided_slice %94 {offsets = [16, 0], sizes = [8, 8], strides = [1, 1]} : vector<32x8xbf16> to vector<8x8xbf16>
    %146 = vector.extract_strided_slice %102 {offsets = [16, 0], sizes = [8, 8], strides = [1, 1]} : vector<32x8xbf16> to vector<8x8xbf16>
    %cst_87 = arith.constant dense<0.000000e+00> : vector<8x8xf32>
    %147 = tpu.matmul %144, %145, %cst_87 {dimension_numbers = #tpu.dot_dimension_numbers<[0], [0], [1], [1], [0, 1, 1, 1], [], []>} : vector<8x8xbf16>, vector<8x8xbf16>, vector<8x8xf32> -> vector<8x8xf32>
    %cst_88 = arith.constant dense<0xFF800000> : vector<8xf32>
    %148 = vector.multi_reduction <maximumf>, %147, %cst_88 [1] : vector<8x8xf32> to vector<8xf32>
    %149 = vector.shape_cast %148 : vector<8xf32> to vector<8x1xf32>
    %150 = vector.broadcast %149 : vector<8x1xf32> to vector<8x8xf32>
    %151 = arith.subf %147, %150 : vector<8x8xf32>
    %152 = math.exp %151 : vector<8x8xf32>
    %cst_89 = arith.constant dense<0.000000e+00> : vector<8xf32>
    %153 = vector.multi_reduction <add>, %152, %cst_89 [1] : vector<8x8xf32> to vector<8xf32>
    %154 = vector.shape_cast %153 : vector<8xf32> to vector<8x1xf32>
    %155 = vector.broadcast %154 : vector<8x1xf32> to vector<8x8xf32>
    %156 = arith.divf %152, %155 : vector<8x8xf32>
    %157 = arith.truncf %156 : vector<8x8xf32> to vector<8x8xbf16>
    %cst_90 = arith.constant dense<0.000000e+00> : vector<8x8xf32>
    %158 = tpu.matmul %157, %146, %cst_90 {dimension_numbers = #tpu.dot_dimension_numbers<[1], [1], [0], [0], [0, 0, 1, 0], [], []>} : vector<8x8xbf16>, vector<8x8xbf16>, vector<8x8xf32> -> vector<8x8xf32>
    %159 = arith.truncf %158 : vector<8x8xf32> to vector<8x8xbf16>
    %c2_91 = arith.constant 2 : index
    %c0_92 = arith.constant 0 : index
    %c0_93 = arith.constant 0 : index
    %160 = vector.load %arg8[%c2_91, %c0_92, %c0_93] : memref<4x8x32xbf16, #tpu.memory_space<vmem>>, vector<1x8x32xbf16>
    %161 = vector.shape_cast %160 : vector<1x8x32xbf16> to vector<8x32xbf16>
    %cst_94 = arith.constant dense<0.000000e+00> : vector<8x32xf32>
    %162 = tpu.matmul %159, %161, %cst_94 {dimension_numbers = #tpu.dot_dimension_numbers<[1], [0], [0], [1], [0, 0, 1, 1], [], []>} : vector<8x8xbf16>, vector<8x32xbf16>, vector<8x32xf32> -> vector<8x32xf32>
    %163 = arith.addf %143, %162 : vector<8x32xf32>
    %164 = vector.extract_strided_slice %86 {offsets = [24, 0], sizes = [8, 8], strides = [1, 1]} : vector<32x8xbf16> to vector<8x8xbf16>
    %165 = vector.extract_strided_slice %94 {offsets = [24, 0], sizes = [8, 8], strides = [1, 1]} : vector<32x8xbf16> to vector<8x8xbf16>
    %166 = vector.extract_strided_slice %102 {offsets = [24, 0], sizes = [8, 8], strides = [1, 1]} : vector<32x8xbf16> to vector<8x8xbf16>
    %cst_95 = arith.constant dense<0.000000e+00> : vector<8x8xf32>
    %167 = tpu.matmul %164, %165, %cst_95 {dimension_numbers = #tpu.dot_dimension_numbers<[0], [0], [1], [1], [0, 1, 1, 1], [], []>} : vector<8x8xbf16>, vector<8x8xbf16>, vector<8x8xf32> -> vector<8x8xf32>
    %cst_96 = arith.constant dense<0xFF800000> : vector<8xf32>
    %168 = vector.multi_reduction <maximumf>, %167, %cst_96 [1] : vector<8x8xf32> to vector<8xf32>
    %169 = vector.shape_cast %168 : vector<8xf32> to vector<8x1xf32>
    %170 = vector.broadcast %169 : vector<8x1xf32> to vector<8x8xf32>
    %171 = arith.subf %167, %170 : vector<8x8xf32>
    %172 = math.exp %171 : vector<8x8xf32>
    %cst_97 = arith.constant dense<0.000000e+00> : vector<8xf32>
    %173 = vector.multi_reduction <add>, %172, %cst_97 [1] : vector<8x8xf32> to vector<8xf32>
    %174 = vector.shape_cast %173 : vector<8xf32> to vector<8x1xf32>
    %175 = vector.broadcast %174 : vector<8x1xf32> to vector<8x8xf32>
    %176 = arith.divf %172, %175 : vector<8x8xf32>
    %177 = arith.truncf %176 : vector<8x8xf32> to vector<8x8xbf16>
    %cst_98 = arith.constant dense<0.000000e+00> : vector<8x8xf32>
    %178 = tpu.matmul %177, %166, %cst_98 {dimension_numbers = #tpu.dot_dimension_numbers<[1], [1], [0], [0], [0, 0, 1, 0], [], []>} : vector<8x8xbf16>, vector<8x8xbf16>, vector<8x8xf32> -> vector<8x8xf32>
    %179 = arith.truncf %178 : vector<8x8xf32> to vector<8x8xbf16>
    %c3_99 = arith.constant 3 : index
    %c0_100 = arith.constant 0 : index
    %c0_101 = arith.constant 0 : index
    %180 = vector.load %arg8[%c3_99, %c0_100, %c0_101] : memref<4x8x32xbf16, #tpu.memory_space<vmem>>, vector<1x8x32xbf16>
    %181 = vector.shape_cast %180 : vector<1x8x32xbf16> to vector<8x32xbf16>
    %cst_102 = arith.constant dense<0.000000e+00> : vector<8x32xf32>
    %182 = tpu.matmul %179, %181, %cst_102 {dimension_numbers = #tpu.dot_dimension_numbers<[1], [0], [0], [1], [0, 0, 1, 1], [], []>} : vector<8x8xbf16>, vector<8x32xbf16>, vector<8x32xf32> -> vector<8x32xf32>
    %183 = arith.addf %163, %182 : vector<8x32xf32>
    %c0_103 = arith.constant 0 : index
    %c0_104 = arith.constant 0 : index
    %184 = vector.load %arg9[%c0_103, %c0_104] : memref<1x32xf32, #tpu.memory_space<vmem>>, vector<1x32xf32>
    %185 = vector.broadcast %184 : vector<1x32xf32> to vector<8x32xf32>
    %186 = arith.addf %183, %185 : vector<8x32xf32>
    %187 = arith.mulf %31, %186 : vector<8x32xf32>
    %188 = arith.addf %1, %187 : vector<8x32xf32>
    %cst_105 = arith.constant dense<0.000000e+00> : vector<8xf32>
    %189 = vector.multi_reduction <add>, %188, %cst_105 [1] : vector<8x32xf32> to vector<8xf32>
    %190 = vector.shape_cast %189 : vector<8xf32> to vector<8x1xf32>
    %cst_106 = arith.constant 3.200000e+01 : f32
    %191 = vector.broadcast %cst_106 : f32 to vector<8x1xf32>
    %192 = arith.divf %190, %191 : vector<8x1xf32>
    %193 = vector.broadcast %192 : vector<8x1xf32> to vector<8x32xf32>
    %194 = arith.subf %188, %193 : vector<8x32xf32>
    %195 = arith.mulf %194, %194 : vector<8x32xf32>
    %cst_107 = arith.constant dense<0.000000e+00> : vector<8xf32>
    %196 = vector.multi_reduction <add>, %195, %cst_107 [1] : vector<8x32xf32> to vector<8xf32>
    %197 = vector.shape_cast %196 : vector<8xf32> to vector<8x1xf32>
    %cst_108 = arith.constant 3.200000e+01 : f32
    %198 = vector.broadcast %cst_108 : f32 to vector<8x1xf32>
    %199 = arith.divf %197, %198 : vector<8x1xf32>
    %200 = vector.broadcast %192 : vector<8x1xf32> to vector<8x32xf32>
    %201 = arith.subf %188, %200 : vector<8x32xf32>
    %cst_109 = arith.constant 9.99999997E-7 : f32
    %202 = vector.broadcast %cst_109 : f32 to vector<8x1xf32>
    %203 = arith.addf %199, %202 : vector<8x1xf32>
    %204 = math.rsqrt %203 : vector<8x1xf32>
    %205 = vector.broadcast %204 : vector<8x1xf32> to vector<8x32xf32>
    %206 = arith.mulf %201, %205 : vector<8x32xf32>
    %cst_110 = arith.constant dense<0.000000e+00> : vector<8xf32>
    %207 = vector.multi_reduction <add>, %206, %cst_110 [1] : vector<8x32xf32> to vector<8xf32>
    %208 = vector.shape_cast %207 : vector<8xf32> to vector<8x1xf32>
    %cst_111 = arith.constant 3.200000e+01 : f32
    %209 = vector.broadcast %cst_111 : f32 to vector<8x1xf32>
    %210 = arith.divf %208, %209 : vector<8x1xf32>
    %211 = vector.broadcast %210 : vector<8x1xf32> to vector<8x32xf32>
    %212 = arith.subf %206, %211 : vector<8x32xf32>
    %213 = arith.mulf %212, %212 : vector<8x32xf32>
    %cst_112 = arith.constant dense<0.000000e+00> : vector<8xf32>
    %214 = vector.multi_reduction <add>, %213, %cst_112 [1] : vector<8x32xf32> to vector<8xf32>
    %215 = vector.shape_cast %214 : vector<8xf32> to vector<8x1xf32>
    %cst_113 = arith.constant 3.200000e+01 : f32
    %216 = vector.broadcast %cst_113 : f32 to vector<8x1xf32>
    %217 = arith.divf %215, %216 : vector<8x1xf32>
    %218 = vector.broadcast %210 : vector<8x1xf32> to vector<8x32xf32>
    %219 = arith.subf %206, %218 : vector<8x32xf32>
    %cst_114 = arith.constant 9.99999997E-7 : f32
    %220 = vector.broadcast %cst_114 : f32 to vector<8x1xf32>
    %221 = arith.addf %217, %220 : vector<8x1xf32>
    %222 = math.rsqrt %221 : vector<8x1xf32>
    %223 = vector.broadcast %222 : vector<8x1xf32> to vector<8x32xf32>
    %224 = arith.mulf %219, %223 : vector<8x32xf32>
    %cst_115 = arith.constant 1.000000e+00 : f32
    %225 = vector.broadcast %cst_115 : f32 to vector<8x32xf32>
    %226 = arith.addf %225, %45 : vector<8x32xf32>
    %227 = arith.mulf %224, %226 : vector<8x32xf32>
    %228 = arith.addf %227, %38 : vector<8x32xf32>
    %229 = arith.truncf %228 : vector<8x32xf32> to vector<8x32xbf16>
    %c0_116 = arith.constant 0 : index
    %c0_117 = arith.constant 0 : index
    %230 = vector.load %arg10[%c0_116, %c0_117] : memref<32x64xbf16, #tpu.memory_space<vmem>>, vector<32x64xbf16>
    %cst_118 = arith.constant dense<0.000000e+00> : vector<8x64xf32>
    %231 = tpu.matmul %229, %230, %cst_118 {dimension_numbers = #tpu.dot_dimension_numbers<[1], [0], [0], [1], [0, 0, 1, 1], [], []>} : vector<8x32xbf16>, vector<32x64xbf16>, vector<8x64xf32> -> vector<8x64xf32>
    %c0_119 = arith.constant 0 : index
    %c0_120 = arith.constant 0 : index
    %232 = vector.load %arg11[%c0_119, %c0_120] : memref<1x64xf32, #tpu.memory_space<vmem>>, vector<1x64xf32>
    %233 = vector.broadcast %232 : vector<1x64xf32> to vector<8x64xf32>
    %234 = arith.addf %231, %233 : vector<8x64xf32>
    %cst_121 = arith.constant 0.000000e+00 : f32
    %235 = vector.broadcast %cst_121 : f32 to vector<8x64xf32>
    %236 = arith.maximumf %234, %235 : vector<8x64xf32>
    %237 = arith.truncf %236 : vector<8x64xf32> to vector<8x64xbf16>
    %c0_122 = arith.constant 0 : index
    %c0_123 = arith.constant 0 : index
    %238 = vector.load %arg12[%c0_122, %c0_123] : memref<64x32xbf16, #tpu.memory_space<vmem>>, vector<64x32xbf16>
    %cst_124 = arith.constant dense<0.000000e+00> : vector<8x32xf32>
    %239 = tpu.matmul %237, %238, %cst_124 {dimension_numbers = #tpu.dot_dimension_numbers<[1], [0], [0], [1], [0, 0, 1, 1], [], []>} : vector<8x64xbf16>, vector<64x32xbf16>, vector<8x32xf32> -> vector<8x32xf32>
    %c0_125 = arith.constant 0 : index
    %c0_126 = arith.constant 0 : index
    %240 = vector.load %arg13[%c0_125, %c0_126] : memref<1x32xf32, #tpu.memory_space<vmem>>, vector<1x32xf32>
    %241 = vector.broadcast %240 : vector<1x32xf32> to vector<8x32xf32>
    %242 = arith.addf %239, %241 : vector<8x32xf32>
    %243 = arith.mulf %52, %242 : vector<8x32xf32>
    %244 = arith.addf %206, %243 : vector<8x32xf32>
    %cst_127 = arith.constant dense<0.000000e+00> : vector<8xf32>
    %245 = vector.multi_reduction <add>, %244, %cst_127 [1] : vector<8x32xf32> to vector<8xf32>
    %246 = vector.shape_cast %245 : vector<8xf32> to vector<8x1xf32>
    %cst_128 = arith.constant 3.200000e+01 : f32
    %247 = vector.broadcast %cst_128 : f32 to vector<8x1xf32>
    %248 = arith.divf %246, %247 : vector<8x1xf32>
    %249 = vector.broadcast %248 : vector<8x1xf32> to vector<8x32xf32>
    %250 = arith.subf %244, %249 : vector<8x32xf32>
    %251 = arith.mulf %250, %250 : vector<8x32xf32>
    %cst_129 = arith.constant dense<0.000000e+00> : vector<8xf32>
    %252 = vector.multi_reduction <add>, %251, %cst_129 [1] : vector<8x32xf32> to vector<8xf32>
    %253 = vector.shape_cast %252 : vector<8xf32> to vector<8x1xf32>
    %cst_130 = arith.constant 3.200000e+01 : f32
    %254 = vector.broadcast %cst_130 : f32 to vector<8x1xf32>
    %255 = arith.divf %253, %254 : vector<8x1xf32>
    %256 = vector.broadcast %248 : vector<8x1xf32> to vector<8x32xf32>
    %257 = arith.subf %244, %256 : vector<8x32xf32>
    %cst_131 = arith.constant 9.99999997E-7 : f32
    %258 = vector.broadcast %cst_131 : f32 to vector<8x1xf32>
    %259 = arith.addf %255, %258 : vector<8x1xf32>
    %260 = math.rsqrt %259 : vector<8x1xf32>
    %261 = vector.broadcast %260 : vector<8x1xf32> to vector<8x32xf32>
    %262 = arith.mulf %257, %261 : vector<8x32xf32>
    %c0_132 = arith.constant 0 : index
    %c0_133 = arith.constant 0 : index
    %c0_134 = arith.constant 0 : index
    %263 = vector.load %arg14[%c0_132, %c0_133, %c0_134] : memref<1x8x32xf32, #tpu.memory_space<vmem>>, vector<1x8x32xf32>
    %264 = vector.shape_cast %263 : vector<1x8x32xf32> to vector<8x32xf32>
    %265 = vector.shape_cast %262 : vector<8x32xf32> to vector<1x8x32xf32>
    tpu.vector_store %arg14[%c0_132, %c0_133, %c0_134], %265 {strides = array<i32>} : memref<1x8x32xf32, #tpu.memory_space<vmem>>, vector<1x8x32xf32>,
    return
  }
  func.func @transform_0(%arg0: i32, %arg1: i32) -> (i32, i32, i32) {
    %c0_i32 = arith.constant 0 : i32
    %c0_i32_0 = arith.constant 0 : i32
    return %arg0, %arg1, %c0_i32 : i32, i32, i32
  }
  func.func @transform_1(%arg0: i32, %arg1: i32) -> (i32, i32, i32) {
    %c0_i32 = arith.constant 0 : i32
    %c0_i32_0 = arith.constant 0 : i32
    return %arg0, %arg1, %c0_i32 : i32, i32, i32
  }
  func.func @transform_2(%arg0: i32, %arg1: i32) -> (i32, i32, i32) {
    %c0_i32 = arith.constant 0 : i32
    %c0_i32_0 = arith.constant 0 : i32
    %c0_i32_1 = arith.constant 0 : i32
    %c0_i32_2 = arith.constant 0 : i32
    return %c0_i32, %c0_i32_0, %c0_i32_1 : i32, i32, i32
  }
  func.func @transform_3(%arg0: i32, %arg1: i32) -> (i32, i32, i32) {
    %c0_i32 = arith.constant 0 : i32
    %c0_i32_0 = arith.constant 0 : i32
    %c0_i32_1 = arith.constant 0 : i32
    %c0_i32_2 = arith.constant 0 : i32
    return %c0_i32, %c0_i32_0, %c0_i32_1 : i32, i32, i32
  }
  func.func @transform_4(%arg0: i32, %arg1: i32) -> (i32, i32, i32) {
    %c0_i32 = arith.constant 0 : i32
    %c0_i32_0 = arith.constant 0 : i32
    %c0_i32_1 = arith.constant 0 : i32
    %c0_i32_2 = arith.constant 0 : i32
    return %c0_i32, %c0_i32_0, %c0_i32_1 : i32, i32, i32
  }
  func.func @transform_5(%arg0: i32, %arg1: i32) -> (i32, i32, i32) {
    %c0_i32 = arith.constant 0 : i32
    %c0_i32_0 = arith.constant 0 : i32
    %c0_i32_1 = arith.constant 0 : i32
    %c0_i32_2 = arith.constant 0 : i32
    return %c0_i32, %c0_i32_0, %c0_i32_1 : i32, i32, i32
  }
  func.func @transform_6(%arg0: i32, %arg1: i32) -> (i32, i32, i32) {
    %c0_i32 = arith.constant 0 : i32
    %c0_i32_0 = arith.constant 0 : i32
    %c0_i32_1 = arith.constant 0 : i32
    %c0_i32_2 = arith.constant 0 : i32
    return %c0_i32, %c0_i32_0, %c0_i32_1 : i32, i32, i32
  }
  func.func @transform_7(%arg0: i32, %arg1: i32) -> (i32, i32) {
    %c0_i32 = arith.constant 0 : i32
    %c0_i32_0 = arith.constant 0 : i32
    %c0_i32_1 = arith.constant 0 : i32
    return %c0_i32, %c0_i32_0 : i32, i32
  }
  func.func @transform_8(%arg0: i32, %arg1: i32) -> (i32, i32) {
    %c0_i32 = arith.constant 0 : i32
    %c0_i32_0 = arith.constant 0 : i32
    %c0_i32_1 = arith.constant 0 : i32
    return %c0_i32, %c0_i32_0 : i32, i32
  }
  func.func @transform_9(%arg0: i32, %arg1: i32) -> (i32, i32) {
    %c0_i32 = arith.constant 0 : i32
    %c0_i32_0 = arith.constant 0 : i32
    %c0_i32_1 = arith.constant 0 : i32
    return %c0_i32, %c0_i32_0 : i32, i32
  }
  func.func @transform_10(%arg0: i32, %arg1: i32) -> (i32, i32) {
    %c0_i32 = arith.constant 0 : i32
    %c0_i32_0 = arith.constant 0 : i32
    %c0_i32_1 = arith.constant 0 : i32
    return %c0_i32, %c0_i32_0 : i32, i32
  }
  func.func @transform_11(%arg0: i32, %arg1: i32) -> (i32, i32) {
    %c0_i32 = arith.constant 0 : i32
    %c0_i32_0 = arith.constant 0 : i32
    %c0_i32_1 = arith.constant 0 : i32
    return %c0_i32, %c0_i32_0 : i32, i32
  }
  func.func @transform_12(%arg0: i32, %arg1: i32) -> (i32, i32, i32) {
    %c0_i32 = arith.constant 0 : i32
    %c0_i32_0 = arith.constant 0 : i32
    return %arg0, %arg1, %c0_i32 : i32, i32, i32
  }
}

</mosaic_0001>

<llo_original>
// kernel: tpu_custom_call.1
$region0: #{tpu_custom_call.1}
  #allocation0 [shape = 'u32[]', space=smem, size = 0x4, offset = 0x4, fixed_abs, tag = 'smem constant byte address 0x4 - core index']
  #allocation1 [shape = 'u32[144,128]{1,0:T(1,128)}', space=vmem, size = 0x12000, scoped, tag = 'internal scratch']
  %s0 = inlined_call_operand.hbm [shape: f32[2,16,32], index: 0, kind: input, shape index: {}]
  %s1 = inlined_call_operand.hbm [shape: f32[2,16,32], index: 1, kind: input, shape index: {}]
  %s2 = inlined_call_operand.vmem [shape: bf16[6,32,32], index: 2, kind: input, shape index: {}]
  %s3 = inlined_call_operand.hbm [shape: f32[6,1,32], index: 3, kind: input, shape index: {}]
  %s4 = inlined_call_operand.vmem [shape: bf16[3,32,32], index: 4, kind: input, shape index: {}]
  %s5 = inlined_call_operand.vmem [shape: f32[3,32,1], index: 5, kind: input, shape index: {}]
  %s6 = inlined_call_operand.vmem [shape: bf16[4,8,32], index: 6, kind: input, shape index: {}]
  %s7 = inlined_call_operand.vmem [shape: f32[1,32], index: 7, kind: input, shape index: {}]
  %s8 = inlined_call_operand.hbm [shape: bf16[32,64], index: 8, kind: input, shape index: {}]
  %s9 = inlined_call_operand.vmem [shape: f32[1,64], index: 9, kind: input, shape index: {}]
  %s10 = inlined_call_operand.vmem [shape: bf16[64,32], index: 10, kind: input, shape index: {}]
  %s11 = inlined_call_operand.vmem [shape: f32[1,32], index: 11, kind: input, shape index: {}]
  %s12 = inlined_call_operand.hbm [shape: f32[2,16,32], index: 12, kind: output, shape index: {}]
  %s13 = sld [smem:[#allocation0]]
  $region97: #{tpu_custom_call.1} parent=0
    _
  %s15 = ssub.s32 1, %s13
  %s16 = scalar_select 0, %s15, %s13
  $region1: #{tpu_custom_call.1} parent=0
    #allocation2 [shape = 'u8[8192]{0}', space=vmem, size = 0x2000, scoped, tag = 'input window, operand 0']
    #allocation3 [shape = 's32[2]{0}', space=sflag, size = 0x8, scoped, tag = 'scoped memory for tpu_custom_call.1']
    #allocation4 [shape = 's32[2]{0}', space=sflag, size = 0x8, scoped, tag = 'scoped memory for tpu_custom_call.1']
    #allocation5 [shape = 'u8[8192]{0}', space=vmem, size = 0x2000, scoped, tag = 'input window, operand 1']
    #allocation6 [shape = 's32[2]{0}', space=sflag, size = 0x8, scoped, tag = 'scoped memory for tpu_custom_call.1']
    #allocation7 [shape = 'u8[3072]{0}', space=vmem, size = 0xc00, scoped, tag = 'input window, operand 3, single buffered']
    #allocation8 [shape = 'u8[8192]{0}', space=vmem, size = 0x2000, scoped, tag = 'input window, operand 8, single buffered']
    #allocation9 [shape = 's32[1]{0}', space=sflag, size = 0x4, scoped, tag = 'scoped memory for tpu_custom_call.1']
    #allocation10 [shape = 'u8[8192]{0}', space=vmem, size = 0x2000, scoped, tag = 'output window, operand 0']
    %17 = vsyncpa [#allocation3], 0
    %s18 = scalar_lea.sflag [#allocation3], 1
    %19 = vsyncpa %s18, 0
    %20 = vsyncpa [#allocation6], 0
    %s21 = scalar_lea.sflag [#allocation6], 1
    %22 = vsyncpa %s21, 0
    %23 = vsyncpa [#allocation9], 0
    %24 = vsyncpa [#allocation4], 0
    %s25 = scalar_lea.sflag [#allocation4], 1
    %26 = vsyncpa %s25, 0
    loop: start=0, step=1, limit=6
    $region2: #{tpu_custom_call.1} parent=1 // loop_pre_header
      _
    $region3: #{tpu_custom_call.1} parent=1 // loop_header
      %s28 = sphi 0, %s32
      %p29 = scmp.ge.s32.totalorder %s28, 6
      %s35 = sphi 0, %s47
      %s36 = sphi 0, %s43
      %s37 = sphi 0, %s35
      %s38 = sphi 0, %s36
      %s39 = sphi 0, %s37
      %s40 = sphi 0, %s38
      %s52 = sphi 0, %s54
      %s55 = sphi 0, %s52
      %s56 = sphi 0, %s55
      %s72 = sphi 0, %s56
      %s80 = sphi 0, %s82
      %s83 = sphi 0, %s80
      %s84 = sphi 0, %s83
      %s100 = sphi 0, %s84
      %s104 = sphi 0, %s104
      %s106 = sphi 0, %s104
      %s107 = sphi 0, %s106
      %s121 = sphi 0, %s107
      %s125 = sphi 0, %s125
      %s127 = sphi 0, %s125
      %s128 = sphi 0, %s127
      %s142 = sphi 0, %s128
      %s146 = sphi 0, %s146
      %s148 = sphi 0, %s146
      %s149 = sphi 0, %s148
      %s163 = sphi 0, %s149
      %s167 = sphi 0, %s167
      %s169 = sphi 0, %s167
      %s170 = sphi 0, %s169
      %s184 = sphi 0, %s170
      %s188 = sphi 0, %s188
      %s190 = sphi 0, %s188
      %s191 = sphi 0, %s190
      %s205 = sphi 0, %s191
      %s209 = sphi 0, %s209
      %s211 = sphi 0, %s209
      %s212 = sphi 0, %s211
      %s226 = sphi 0, %s212
      %s230 = sphi 0, %s230
      %s232 = sphi 0, %s230
      %s233 = sphi 0, %s232
      %s247 = sphi 0, %s233
      %s251 = sphi 0, %s251
      %s253 = sphi 0, %s251
      %s254 = sphi 0, %s253
      %s268 = sphi 0, %s254
      %s272 = sphi 0, %s272
      %s274 = sphi 0, %s272
      %s275 = sphi 0, %s274
      %s289 = sphi 0, %s275
      %s293 = sphi 0, %s293
      %s295 = sphi 0, %s293
      %s296 = sphi 0, %s295
      %s310 = sphi 0, %s296
      %s318 = sphi 0, %s320
      %s321 = sphi 0, %s318
      %s322 = sphi 0, %s321
      %s338 = sphi 0, %s322
    $region4: #{tpu_custom_call.1} parent=1 // loop_header_branch
      %31 = sbr.rel (%p29) target = $region8
    $region5: #{tpu_custom_call.1} parent=1 // loop_body
      %s33 = ssub.s32 %s28, 1
      %s34 = ssub.s32 %s28, 2
      %s41 = sadd.s32 1, %s36
      %p42 = scmp.ge.s32.totalorder %s41, 2
      %s43 = scalar_select %p42, 0, %s41
      %s44 = sadd.s32 1, %s35
      %s45 = scalar_select %p42, %s44, %s35
      %p46 = scmp.ge.s32.totalorder %s45, 2
      %s47 = scalar_select %p46, 0, %s45
      %s48 = ssub.s32 %s35, %s47
      %s49 = ssub.s32 %s36, %s43
      %s50 = sor.u32 %s48, %s49
      %p51 = scmp.eq.s32.totalorder %s50, 0
      %s53 = sadd.s32 %s52, 1
      %s54 = scalar_select %p51, %s52, %s53
      %p57 = pneg %p51
      %p58 = scmp.eq.s32.totalorder %s28, 3
      %p59 = por %p57, %p58
      %p60 = scmp.ne.s32.totalorder %s52, %s55
      %p61 = scmp.eq.s32.totalorder %s28, 0
      %p62 = por %p60, %p61
      %p63 = scmp.ne.s32.totalorder %s52, %s55
      %p64 = scmp.eq.s32.totalorder %s33, 3
      %p65 = por %p63, %p64
      %p66 = scmp.ne.s32.totalorder %s55, %s56
      %p67 = scmp.eq.s32.totalorder %s33, 0
      %p68 = por %p66, %p67
      %p69 = scmp.ne.s32.totalorder %s55, %s56
      %p70 = scmp.eq.s32.totalorder %s34, 3
      %p71 = por %p69, %p70
      %p73 = scmp.ne.s32.totalorder %s56, %s72
      %p74 = scmp.eq.s32.totalorder %s34, 0
      %p75 = por %p73, %p74
      %s76 = ssub.s32 %s35, %s47
      %s77 = ssub.s32 %s36, %s43
      %s78 = sor.u32 %s76, %s77
      %p79 = scmp.eq.s32.totalorder %s78, 0
      %s81 = sadd.s32 %s80, 1
      %s82 = scalar_select %p79, %s80, %s81
      %p85 = pneg %p79
      %p86 = scmp.eq.s32.totalorder %s28, 3
      %p87 = por %p85, %p86
      %p88 = scmp.ne.s32.totalorder %s80, %s83
      %p89 = scmp.eq.s32.totalorder %s28, 0
      %p90 = por %p88, %p89
      %p91 = scmp.ne.s32.totalorder %s80, %s83
      %p92 = scmp.eq.s32.totalorder %s33, 3
      %p93 = por %p91, %p92
      %p94 = scmp.ne.s32.totalorder %s83, %s84
      %p95 = scmp.eq.s32.totalorder %s33, 0
      %p96 = por %p94, %p95
      %p97 = scmp.ne.s32.totalorder %s83, %s84
      %p98 = scmp.eq.s32.totalorder %s34, 3
      %p99 = por %p97, %p98
      %p101 = scmp.ne.s32.totalorder %s84, %s100
      %p102 = scmp.eq.s32.totalorder %s34, 0
      %p103 = por %p101, %p102
      %s105 = sadd.s32 %s104, 1
      %p108 = scmp.eq.s32.totalorder %s28, 3
      %p109 = scmp.ne.s32.totalorder %s104, %s106
      %p110 = scmp.eq.s32.totalorder %s28, 0
      %p111 = por %p109, %p110
      %p112 = scmp.ne.s32.totalorder %s104, %s106
      %p113 = scmp.eq.s32.totalorder %s33, 3
      %p114 = por %p112, %p113
      %p115 = scmp.ne.s32.totalorder %s106, %s107
      %p116 = scmp.eq.s32.totalorder %s33, 0
      %p117 = por %p115, %p116
      %p118 = scmp.ne.s32.totalorder %s106, %s107
      %p119 = scmp.eq.s32.totalorder %s34, 3
      %p120 = por %p118, %p119
      %p122 = scmp.ne.s32.totalorder %s107, %s121
      %p123 = scmp.eq.s32.totalorder %s34, 0
      %p124 = por %p122, %p123
      %s126 = sadd.s32 %s125, 1
      %p129 = scmp.eq.s32.totalorder %s28, 3
      %p130 = scmp.ne.s32.totalorder %s125, %s127
      %p131 = scmp.eq.s32.totalorder %s28, 0
      %p132 = por %p130, %p131
      %p133 = scmp.ne.s32.totalorder %s125, %s127
      %p134 = scmp.eq.s32.totalorder %s33, 3
      %p135 = por %p133, %p134
      %p136 = scmp.ne.s32.totalorder %s127, %s128
      %p137 = scmp.eq.s32.totalorder %s33, 0
      %p138 = por %p136, %p137
      %p139 = scmp.ne.s32.totalorder %s127, %s128
      %p140 = scmp.eq.s32.totalorder %s34, 3
      %p141 = por %p139, %p140
      %p143 = scmp.ne.s32.totalorder %s128, %s142
      %p144 = scmp.eq.s32.totalorder %s34, 0
      %p145 = por %p143, %p144
      %s147 = sadd.s32 %s146, 1
      %p150 = scmp.eq.s32.totalorder %s28, 3
      %p151 = scmp.ne.s32.totalorder %s146, %s148
      %p152 = scmp.eq.s32.totalorder %s28, 0
      %p153 = por %p151, %p152
      %p154 = scmp.ne.s32.totalorder %s146, %s148
      %p155 = scmp.eq.s32.totalorder %s33, 3
      %p156 = por %p154, %p155
      %p157 = scmp.ne.s32.totalorder %s148, %s149
      %p158 = scmp.eq.s32.totalorder %s33, 0
      %p159 = por %p157, %p158
      %p160 = scmp.ne.s32.totalorder %s148, %s149
      %p161 = scmp.eq.s32.totalorder %s34, 3
      %p162 = por %p160, %p161
      %p164 = scmp.ne.s32.totalorder %s149, %s163
      %p165 = scmp.eq.s32.totalorder %s34, 0
      %p166 = por %p164, %p165
      %s168 = sadd.s32 %s167, 1
      %p171 = scmp.eq.s32.totalorder %s28, 3
      %p172 = scmp.ne.s32.totalorder %s167, %s169
      %p173 = scmp.eq.s32.totalorder %s28, 0
      %p174 = por %p172, %p173
      %p175 = scmp.ne.s32.totalorder %s167, %s169
      %p176 = scmp.eq.s32.totalorder %s33, 3
      %p177 = por %p175, %p176
      %p178 = scmp.ne.s32.totalorder %s169, %s170
      %p179 = scmp.eq.s32.totalorder %s33, 0
      %p180 = por %p178, %p179
      %p181 = scmp.ne.s32.totalorder %s169, %s170
      %p182 = scmp.eq.s32.totalorder %s34, 3
      %p183 = por %p181, %p182
      %p185 = scmp.ne.s32.totalorder %s170, %s184
      %p186 = scmp.eq.s32.totalorder %s34, 0
      %p187 = por %p185, %p186
      %s189 = sadd.s32 %s188, 1
      %p192 = scmp.eq.s32.totalorder %s28, 3
      %p193 = scmp.ne.s32.totalorder %s188, %s190
      %p194 = scmp.eq.s32.totalorder %s28, 0
      %p195 = por %p193, %p194
      %p196 = scmp.ne.s32.totalorder %s188, %s190
      %p197 = scmp.eq.s32.totalorder %s33, 3
      %p198 = por %p196, %p197
      %p199 = scmp.ne.s32.totalorder %s190, %s191
      %p200 = scmp.eq.s32.totalorder %s33, 0
      %p201 = por %p199, %p200
      %p202 = scmp.ne.s32.totalorder %s190, %s191
      %p203 = scmp.eq.s32.totalorder %s34, 3
      %p204 = por %p202, %p203
      %p206 = scmp.ne.s32.totalorder %s191, %s205
      %p207 = scmp.eq.s32.totalorder %s34, 0
      %p208 = por %p206, %p207
      %s210 = sadd.s32 %s209, 1
      %p213 = scmp.eq.s32.totalorder %s28, 3
      %p214 = scmp.ne.s32.totalorder %s209, %s211
      %p215 = scmp.eq.s32.totalorder %s28, 0
      %p216 = por %p214, %p215
      %p217 = scmp.ne.s32.totalorder %s209, %s211
      %p218 = scmp.eq.s32.totalorder %s33, 3
      %p219 = por %p217, %p218
      %p220 = scmp.ne.s32.totalorder %s211, %s212
      %p221 = scmp.eq.s32.totalorder %s33, 0
      %p222 = por %p220, %p221
      %p223 = scmp.ne.s32.totalorder %s211, %s212
      %p224 = scmp.eq.s32.totalorder %s34, 3
      %p225 = por %p223, %p224
      %p227 = scmp.ne.s32.totalorder %s212, %s226
      %p228 = scmp.eq.s32.totalorder %s34, 0
      %p229 = por %p227, %p228
      %s231 = sadd.s32 %s230, 1
      %p234 = scmp.eq.s32.totalorder %s28, 3
      %p235 = scmp.ne.s32.totalorder %s230, %s232
      %p236 = scmp.eq.s32.totalorder %s28, 0
      %p237 = por %p235, %p236
      %p238 = scmp.ne.s32.totalorder %s230, %s232
      %p239 = scmp.eq.s32.totalorder %s33, 3
      %p240 = por %p238, %p239
      %p241 = scmp.ne.s32.totalorder %s232, %s233
      %p242 = scmp.eq.s32.totalorder %s33, 0
      %p243 = por %p241, %p242
      %p244 = scmp.ne.s32.totalorder %s232, %s233
      %p245 = scmp.eq.s32.totalorder %s34, 3
      %p246 = por %p244, %p245
      %p248 = scmp.ne.s32.totalorder %s233, %s247
      %p249 = scmp.eq.s32.totalorder %s34, 0
      %p250 = por %p248, %p249
      %s252 = sadd.s32 %s251, 1
      %p255 = scmp.eq.s32.totalorder %s28, 3
      %p256 = scmp.ne.s32.totalorder %s251, %s253
      %p257 = scmp.eq.s32.totalorder %s28, 0
      %p258 = por %p256, %p257
      %p259 = scmp.ne.s32.totalorder %s251, %s253
      %p260 = scmp.eq.s32.totalorder %s33, 3
      %p261 = por %p259, %p260
      %p262 = scmp.ne.s32.totalorder %s253, %s254
      %p263 = scmp.eq.s32.totalorder %s33, 0
      %p264 = por %p262, %p263
      %p265 = scmp.ne.s32.totalorder %s253, %s254
      %p266 = scmp.eq.s32.totalorder %s34, 3
      %p267 = por %p265, %p266
      %p269 = scmp.ne.s32.totalorder %s254, %s268
      %p270 = scmp.eq.s32.totalorder %s34, 0
      %p271 = por %p269, %p270
      %s273 = sadd.s32 %s272, 1
      %p276 = scmp.eq.s32.totalorder %s28, 3
      %p277 = scmp.ne.s32.totalorder %s272, %s274
      %p278 = scmp.eq.s32.totalorder %s28, 0
      %p279 = por %p277, %p278
      %p280 = scmp.ne.s32.totalorder %s272, %s274
      %p281 = scmp.eq.s32.totalorder %s33, 3
      %p282 = por %p280, %p281
      %p283 = scmp.ne.s32.totalorder %s274, %s275
      %p284 = scmp.eq.s32.totalorder %s33, 0
      %p285 = por %p283, %p284
      %p286 = scmp.ne.s32.totalorder %s274, %s275
      %p287 = scmp.eq.s32.totalorder %s34, 3
      %p288 = por %p286, %p287
      %p290 = scmp.ne.s32.totalorder %s275, %s289
      %p291 = scmp.eq.s32.totalorder %s34, 0
      %p292 = por %p290, %p291
      %s294 = sadd.s32 %s293, 1
      %p297 = scmp.eq.s32.totalorder %s28, 3
      %p298 = scmp.ne.s32.totalorder %s293, %s295
      %p299 = scmp.eq.s32.totalorder %s28, 0
      %p300 = por %p298, %p299
      %p301 = scmp.ne.s32.totalorder %s293, %s295
      %p302 = scmp.eq.s32.totalorder %s33, 3
      %p303 = por %p301, %p302
      %p304 = scmp.ne.s32.totalorder %s295, %s296
      %p305 = scmp.eq.s32.totalorder %s33, 0
      %p306 = por %p304, %p305
      %p307 = scmp.ne.s32.totalorder %s295, %s296
      %p308 = scmp.eq.s32.totalorder %s34, 3
      %p309 = por %p307, %p308
      %p311 = scmp.ne.s32.totalorder %s296, %s310
      %p312 = scmp.eq.s32.totalorder %s34, 0
      %p313 = por %p311, %p312
      %s314 = ssub.s32 %s35, %s47
      %s315 = ssub.s32 %s36, %s43
      %s316 = sor.u32 %s314, %s315
      %p317 = scmp.eq.s32.totalorder %s316, 0
      %s319 = sadd.s32 %s318, 1
      %s320 = scalar_select %p317, %s318, %s319
      %p323 = pneg %p317
      %p324 = scmp.eq.s32.totalorder %s28, 3
      %p325 = por %p323, %p324
      %p326 = scmp.ne.s32.totalorder %s318, %s321
      %p327 = scmp.eq.s32.totalorder %s28, 0
      %p328 = por %p326, %p327
      %p329 = scmp.ne.s32.totalorder %s318, %s321
      %p330 = scmp.eq.s32.totalorder %s33, 3
      %p331 = por %p329, %p330
      %p332 = scmp.ne.s32.totalorder %s321, %s322
      %p333 = scmp.eq.s32.totalorder %s33, 0
      %p334 = por %p332, %p333
      %p335 = scmp.ne.s32.totalorder %s321, %s322
      %p336 = scmp.eq.s32.totalorder %s34, 3
      %p337 = por %p335, %p336
      %p339 = scmp.ne.s32.totalorder %s322, %s338
      %p340 = scmp.eq.s32.totalorder %s34, 0
      %p341 = por %p339, %p340
      %p342 = scmp.le.s32.totalorder 1, %s28
      %p343 = scmp.lt.s32.totalorder %s28, 5
      %p344 = pnand %p342, %p343
      %p345 = pneg %p344
      // Predicated region
      $region9: #{tpu_custom_call.1} parent=5 // pred_check
        _
      $region10: #{tpu_custom_call.1} parent=5 // pred_check_branch
        %347 = sbr.rel (%p344) target = $region12
      $region11: #{tpu_custom_call.1} parent=5 // pred_region
        %s348 = ssub.s32 %s28, 1
        // Predicated region
        $region13: #{tpu_custom_call.1} parent=11 // pred_check
          %p349 = pneg %p117
        $region14: #{tpu_custom_call.1} parent=11 // pred_check_branch
          %351 = sbr.rel (%p349) target = $region16
        $region15: #{tpu_custom_call.1} parent=11 // pred_region
          _
        $region16: #{tpu_custom_call.1} parent=11 // pred_fallthru
          _
        // Predicated region
        $region17: #{tpu_custom_call.1} parent=11 // pred_check
          %p352 = pneg %p138
        $region18: #{tpu_custom_call.1} parent=11 // pred_check_branch
          %354 = sbr.rel (%p352) target = $region20
        $region19: #{tpu_custom_call.1} parent=11 // pred_region
          %s356 = ssub.s32 96, 96
          %357 = vsyncadd [#allocation6], %s356
          %s358 = sshll.u32 [#allocation7], 4
          %s359 = int_to_ptr.vmem [resolvable:$true] %s358
          %364 = dma.hbm_to_vmem [thread:$0]  %s3, 96, %s359, [#allocation6], 16, 16, 1
        $region20: #{tpu_custom_call.1} parent=11 // pred_fallthru
          _
        // Predicated region
        $region21: #{tpu_custom_call.1} parent=11 // pred_check
          %p365 = pneg %p159
        $region22: #{tpu_custom_call.1} parent=11 // pred_check_branch
          %367 = sbr.rel (%p365) target = $region24
        $region23: #{tpu_custom_call.1} parent=11 // pred_region
          _
        $region24: #{tpu_custom_call.1} parent=11 // pred_fallthru
          _
        // Predicated region
        $region25: #{tpu_custom_call.1} parent=11 // pred_check
          %p368 = pneg %p180
        $region26: #{tpu_custom_call.1} parent=11 // pred_check_branch
          %370 = sbr.rel (%p368) target = $region28
        $region27: #{tpu_custom_call.1} parent=11 // pred_region
          _
        $region28: #{tpu_custom_call.1} parent=11 // pred_fallthru
          _
        // Predicated region
        $region29: #{tpu_custom_call.1} parent=11 // pred_check
          %p371 = pneg %p201
        $region30: #{tpu_custom_call.1} parent=11 // pred_check_branch
          %373 = sbr.rel (%p371) target = $region32
        $region31: #{tpu_custom_call.1} parent=11 // pred_region
          _
        $region32: #{tpu_custom_call.1} parent=11 // pred_fallthru
          _
        // Predicated region
        $region33: #{tpu_custom_call.1} parent=11 // pred_check
          %p374 = pneg %p222
        $region34: #{tpu_custom_call.1} parent=11 // pred_check_branch
          %376 = sbr.rel (%p374) target = $region36
        $region35: #{tpu_custom_call.1} parent=11 // pred_region
          _
        $region36: #{tpu_custom_call.1} parent=11 // pred_fallthru
          _
        // Predicated region
        $region37: #{tpu_custom_call.1} parent=11 // pred_check
          %p377 = pneg %p243
        $region38: #{tpu_custom_call.1} parent=11 // pred_check_branch
          %379 = sbr.rel (%p377) target = $region40
        $region39: #{tpu_custom_call.1} parent=11 // pred_region
          %s381 = ssub.s32 256, 256
          %382 = vsyncadd [#allocation9], %s381
          %s383 = sshll.u32 [#allocation8], 4
          %s384 = int_to_ptr.vmem [resolvable:$true] %s383
          %389 = dma.hbm_to_vmem [thread:$0]  %s8, 256, %s384, [#allocation9], 64, 64, 4
        $region40: #{tpu_custom_call.1} parent=11 // pred_fallthru
          _
        // Predicated region
        $region41: #{tpu_custom_call.1} parent=11 // pred_check
          %p390 = pneg %p264
        $region42: #{tpu_custom_call.1} parent=11 // pred_check_branch
          %392 = sbr.rel (%p390) target = $region44
        $region43: #{tpu_custom_call.1} parent=11 // pred_region
          _
        $region44: #{tpu_custom_call.1} parent=11 // pred_fallthru
          _
        // Predicated region
        $region45: #{tpu_custom_call.1} parent=11 // pred_check
          %p393 = pneg %p285
        $region46: #{tpu_custom_call.1} parent=11 // pred_check_branch
          %395 = sbr.rel (%p393) target = $region48
        $region47: #{tpu_custom_call.1} parent=11 // pred_region
          _
        $region48: #{tpu_custom_call.1} parent=11 // pred_fallthru
          _
        // Predicated region
        $region49: #{tpu_custom_call.1} parent=11 // pred_check
          %p396 = pneg %p306
        $region50: #{tpu_custom_call.1} parent=11 // pred_check_branch
          %398 = sbr.rel (%p396) target = $region52
        $region51: #{tpu_custom_call.1} parent=11 // pred_region
          _
        $region52: #{tpu_custom_call.1} parent=11 // pred_fallthru
          _
      $region12: #{tpu_custom_call.1} parent=5 // pred_fallthru
        _
      %p399 = scmp.lt.s32.totalorder %s28, 4
      // Predicated region
      $region53: #{tpu_custom_call.1} parent=5 // pred_check
        %p400 = pneg %p399
      $region54: #{tpu_custom_call.1} parent=5 // pred_check_branch
        %402 = sbr.rel (%p400) target = $region56
      $region55: #{tpu_custom_call.1} parent=5 // pred_region
        // Predicated region
        $region57: #{tpu_custom_call.1} parent=55 // pred_check
          %p403 = pneg %p62
        $region58: #{tpu_custom_call.1} parent=55 // pred_check_branch
          %405 = sbr.rel (%p403) target = $region60
        $region59: #{tpu_custom_call.1} parent=55 // pred_region
          %s406 = sand.u32 %s52, 1
          %s407 = scalar_lea.sflag [#allocation3], %s406
          %s408 = sand.u32 %s52, 1
          %s409 = smul.addr %s408, 8
          %s410 = scalar_lea.vmem [#allocation2], %s409
          %s412 = ssub.s32 128, 128
          %413 = vsyncadd %s407, %s412
          %s414 = smul.addr %s35, 2
          %s415 = sadd.s32 %s36, %s414
          %s416 = smul.addr %s415, 128
          %s417 = scalar_lea.hbm %s0, %s416
          %s419 = sshll.u32 %s410, 4
          %s420 = int_to_ptr.vmem [resolvable:$true] %s419
          %422 = dma.hbm_to_vmem [thread:$0]  %s417, 128, %s420, %s407
        $region60: #{tpu_custom_call.1} parent=55 // pred_fallthru
          _
        // Predicated region
        $region61: #{tpu_custom_call.1} parent=55 // pred_check
          %p423 = pneg %p90
        $region62: #{tpu_custom_call.1} parent=55 // pred_check_branch
          %425 = sbr.rel (%p423) target = $region64
        $region63: #{tpu_custom_call.1} parent=55 // pred_region
          %s426 = sand.u32 %s28, 1
          %s427 = scalar_lea.sflag [#allocation6], %s426
          %s428 = sand.u32 %s80, 1
          %s429 = smul.addr %s428, 8
          %s430 = scalar_lea.vmem [#allocation5], %s429
          %s432 = ssub.s32 128, 128
          %433 = vsyncadd %s427, %s432
          %s434 = smul.addr %s35, 2
          %s435 = sadd.s32 %s36, %s434
          %s436 = smul.addr %s435, 128
          %s437 = scalar_lea.hbm %s1, %s436
          %s439 = sshll.u32 %s430, 4
          %s440 = int_to_ptr.vmem [resolvable:$true] %s439
          %442 = dma.hbm_to_vmem [thread:$0]  %s437, 128, %s440, %s427
        $region64: #{tpu_custom_call.1} parent=55 // pred_fallthru
          _
      $region56: #{tpu_custom_call.1} parent=5 // pred_fallthru
        _
      %p443 = scmp.le.s32.totalorder 1, %s28
      %p444 = scmp.lt.s32.totalorder %s28, 5
      %p445 = pnand %p443, %p444
      %p446 = pneg %p445
      // Predicated region
      $region65: #{tpu_custom_call.1} parent=5 // pred_check
        _
      $region66: #{tpu_custom_call.1} parent=5 // pred_check_branch
        %448 = sbr.rel (%p445) target = $region68
      $region67: #{tpu_custom_call.1} parent=5 // pred_region
        %s449 = ssub.s32 %s28, 1
        %s450 = sand.u32 %s55, 1
        %s451 = scalar_lea.sflag [#allocation3], %s450
        %s452 = sand.u32 %s55, 1
        %s453 = smul.addr %s452, 8
        %s454 = scalar_lea.vmem [#allocation2], %s453
        // Predicated region
        $region69: #{tpu_custom_call.1} parent=67 // pred_check
          %p455 = pneg %p68
        $region70: #{tpu_custom_call.1} parent=67 // pred_check_branch
          %457 = sbr.rel (%p455) target = $region72
        $region71: #{tpu_custom_call.1} parent=67 // pred_region
          %458 = dma.done %s451, 128
        $region72: #{tpu_custom_call.1} parent=67 // pred_fallthru
          _
        %s459 = sand.u32 %s33, 1
        %s460 = scalar_lea.sflag [#allocation6], %s459
        %s461 = sand.u32 %s83, 1
        %s462 = smul.addr %s461, 8
        %s463 = scalar_lea.vmem [#allocation5], %s462
        // Predicated region
        $region73: #{tpu_custom_call.1} parent=67 // pred_check
          %p464 = pneg %p96
        $region74: #{tpu_custom_call.1} parent=67 // pred_check_branch
          %466 = sbr.rel (%p464) target = $region76
        $region75: #{tpu_custom_call.1} parent=67 // pred_region
          %467 = dma.done %s460, 128
        $region76: #{tpu_custom_call.1} parent=67 // pred_fallthru
          _
        // Predicated region
        $region77: #{tpu_custom_call.1} parent=67 // pred_check
          %p468 = pneg %p138
        $region78: #{tpu_custom_call.1} parent=67 // pred_check_branch
          %470 = sbr.rel (%p468) target = $region80
        $region79: #{tpu_custom_call.1} parent=67 // pred_region
          %471 = dma.done [#allocation6], 96
        $region80: #{tpu_custom_call.1} parent=67 // pred_fallthru
          _
        // Predicated region
        $region81: #{tpu_custom_call.1} parent=67 // pred_check
          %p472 = pneg %p243
        $region82: #{tpu_custom_call.1} parent=67 // pred_check_branch
          %474 = sbr.rel (%p472) target = $region84
        $region83: #{tpu_custom_call.1} parent=67 // pred_region
          %475 = dma.done [#allocation9], 256
        $region84: #{tpu_custom_call.1} parent=67 // pred_fallthru
          _
        %s476 = sand.u32 %s55, 1
        %s477 = scalar_lea.sflag [#allocation3], %s476
        %s478 = sand.u32 %s55, 1
        %s479 = smul.addr %s478, 8
        %s480 = scalar_lea.vmem [#allocation2], %s479
        %p481 = pneg %p68
        %p482 = pneg %p65
        %s483 = sand.u32 %s33, 1
        %s484 = scalar_lea.sflag [#allocation6], %s483
        %s485 = sand.u32 %s83, 1
        %s486 = smul.addr %s485, 8
        %s487 = scalar_lea.vmem [#allocation5], %s486
        %p488 = pneg %p96
        %p489 = pneg %p93
        %p490 = pneg %p117
        %p491 = pneg %p114
        %p492 = pneg %p138
        %p493 = pneg %p135
        %p494 = pneg %p159
        %p495 = pneg %p156
        %p496 = pneg %p180
        %p497 = pneg %p177
        %p498 = pneg %p201
        %p499 = pneg %p198
        %p500 = pneg %p222
        %p501 = pneg %p219
        %p502 = pneg %p243
        %p503 = pneg %p240
        %p504 = pneg %p264
        %p505 = pneg %p261
        %p506 = pneg %p285
        %p507 = pneg %p282
        %p508 = pneg %p306
        %p509 = pneg %p303
        %p510 = pneg %p334
        %p511 = pneg %p331
        %s512 = sand.u32 %s321, 1
        %s513 = scalar_lea.sflag [#allocation4], %s512
        %s514 = sand.u32 %s321, 1
        %s515 = smul.addr %s514, 8
        %s516 = scalar_lea.vmem [#allocation10], %s515
        %v518 = vld [vmem:[%s454] sm:$0xff]
        %v519 = vld [vmem:[%s463] sm:$0xff]
        %v520 = vxor.u32 %v519, 2147483648
        %v521 = vmul.f32 %v520, 1.442695
        %v522 = vpow.pop %v521
        %v523 = vadd.f32 %v522, 1.0
        %v524 = vrcp.pop %v523
        %v525 = vmul.f32 1.0, %v524
        %v526 = vmul.f32 %v519, %v525
        %v527 = vpack.c.bf16 %v526, %v526
        %v528 = vld [vmem:[%s2] sm:$0xf]
        %v529 = vld [vmem:[%s2 + $0x4] sm:$0xf]
        %v530 = vld [vmem:[%s2 + $0x8] sm:$0xf]
        %v531 = vld [vmem:[%s2 + $0xc] sm:$0xf]
        %v532 = vld [vmem:[#allocation7] sm:$0x1]
        %v534 = vlaneseq
        %v535 = vshrl.u32 %v534, 7
        %v536 = vsub.s32 0, %v535
        %v537 = vrot.slane %v532, %v536
        %v543 = vunpack.c.l.b16 %v528
        %v544 = vunpack.c.l.b16 %v529
        %v545 = vunpack.c.l.b16 %v530
        %v546 = vunpack.c.l.b16 %v531
        %v547 = vpack.c.b16 %v544, %v543
        %v548 = vpack.c.b16 %v546, %v545
        %vm551 = vcmask 261120
        %v553 = vsel %vm551, %v527, 0
        %555 = vmatprep.subr.bf16.mxu0 0
        %556 = vmatpush1.bf16.msra.mxu0 %v547
        %557 = vmatprep.subr.bf16.mxu0 0
        %558 = vmatpush1.bf16.msra.mxu0 %v548
        %559 = vmatprep.subr.bf16.mxu0 0
        %560 = vmatpush1.bf16.msra.mxu0 0
        %561 = vmatprep.subr.bf16.mxu0 0
        %562 = vmatpush1.bf16.msra.mxu0 0
        %563 = vmatprep.subr.bf16.mxu0 0
        %564 = vmatpush1.bf16.msra.mxu0 0
        %565 = vmatprep.subr.bf16.mxu0 0
        %566 = vmatpush1.bf16.msra.mxu0 0
        %567 = vmatprep.subr.bf16.mxu0 0
        %568 = vmatpush1.bf16.msra.mxu0 0
        %569 = vmatprep.subr.bf16.mxu0 0
        %570 = vmatpush1.bf16.msra.mxu0 0
        %571 = vmatprep.subr.bf16.mxu0 0
        %572 = vmatpush1.bf16.msra.mxu0 0
        %573 = vmatprep.subr.bf16.mxu0 0
        %574 = vmatpush1.bf16.msra.mxu0 0
        %575 = vmatprep.subr.bf16.mxu0 0
        %576 = vmatpush1.bf16.msra.mxu0 0
        %577 = vmatprep.subr.bf16.mxu0 0
        %578 = vmatpush1.bf16.msra.mxu0 0
        %579 = vmatprep.subr.bf16.mxu0 0
        %580 = vmatpush1.bf16.msra.mxu0 0
        %581 = vmatprep.subr.bf16.mxu0 0
        %582 = vmatpush1.bf16.msra.mxu0 0
        %583 = vmatprep.subr.bf16.mxu0 0
        %584 = vmatpush1.bf16.msra.mxu0 0
        %585 = vmatprep.subr.bf16.mxu0 0
        %586 = vmatpush1.bf16.msra.mxu0 0
        %587 = vmatprep.mubr.bf16.mxu0 0
        %588 = vmatmul.mubr.bf16.gmra.mrb[0].mxu0 %v553
        %v589 = vpop.f32.mrb[0].mxu0
        %v590 = vadd.f32 %v537, %v589
        %v591 = vpop.f32.mrb[0].mxu0
        %v592 = vpop.f32.mrb[0].mxu0
        %v593 = vpop.f32.mrb[0].mxu0
        %594 = vdwg.mxu0
        %s595 = scalar_lea.vmem %s2, 16
        %v596 = vld [vmem:[%s595] sm:$0xf]
        %v597 = vld [vmem:[%s595 + $0x4] sm:$0xf]
        %v598 = vld [vmem:[%s595 + $0x8] sm:$0xf]
        %v599 = vld [vmem:[%s595 + $0xc] sm:$0xf]
        %s600 = scalar_lea.vmem [#allocation7], 1
        %v601 = vld [vmem:[%s600] sm:$0x1]
        %v603 = vlaneseq
        %v604 = vshrl.u32 %v603, 7
        %v605 = vsub.s32 0, %v604
        %v606 = vrot.slane %v601, %v605
        %v612 = vunpack.c.l.b16 %v596
        %v613 = vunpack.c.l.b16 %v597
        %v614 = vunpack.c.l.b16 %v598
        %v615 = vunpack.c.l.b16 %v599
        %v616 = vpack.c.b16 %v613, %v612
        %v617 = vpack.c.b16 %v615, %v614
        %620 = vmatprep.subr.bf16.mxu0 0
        %621 = vmatpush1.bf16.msra.mxu0 %v616
        %622 = vmatprep.subr.bf16.mxu0 0
        %623 = vmatpush1.bf16.msra.mxu0 %v617
        %624 = vmatprep.subr.bf16.mxu0 0
        %625 = vmatpush1.bf16.msra.mxu0 0
        %626 = vmatprep.subr.bf16.mxu0 0
        %627 = vmatpush1.bf16.msra.mxu0 0
        %628 = vmatprep.subr.bf16.mxu0 0
        %629 = vmatpush1.bf16.msra.mxu0 0
        %630 = vmatprep.subr.bf16.mxu0 0
        %631 = vmatpush1.bf16.msra.mxu0 0
        %632 = vmatprep.subr.bf16.mxu0 0
        %633 = vmatpush1.bf16.msra.mxu0 0
        %634 = vmatprep.subr.bf16.mxu0 0
        %635 = vmatpush1.bf16.msra.mxu0 0
        %636 = vmatprep.subr.bf16.mxu0 0
        %637 = vmatpush1.bf16.msra.mxu0 0
        %638 = vmatprep.subr.bf16.mxu0 0
        %639 = vmatpush1.bf16.msra.mxu0 0
        %640 = vmatprep.subr.bf16.mxu0 0
        %641 = vmatpush1.bf16.msra.mxu0 0
        %642 = vmatprep.subr.bf16.mxu0 0
        %643 = vmatpush1.bf16.msra.mxu0 0
        %644 = vmatprep.subr.bf16.mxu0 0
        %645 = vmatpush1.bf16.msra.mxu0 0
        %646 = vmatprep.subr.bf16.mxu0 0
        %647 = vmatpush1.bf16.msra.mxu0 0
        %648 = vmatprep.subr.bf16.mxu0 0
        %649 = vmatpush1.bf16.msra.mxu0 0
        %650 = vmatprep.subr.bf16.mxu0 0
        %651 = vmatpush1.bf16.msra.mxu0 0
        %652 = vmatprep.mubr.bf16.mxu0 0
        %653 = vmatmul.mubr.bf16.gmra.mrb[0].mxu0 %v553
        %v654 = vpop.f32.mrb[0].mxu0
        %v655 = vadd.f32 %v606, %v654
        %v656 = vpop.f32.mrb[0].mxu0
        %v657 = vpop.f32.mrb[0].mxu0
        %v658 = vpop.f32.mrb[0].mxu0
        %659 = vdwg.mxu0
        %s660 = scalar_lea.vmem %s2, 32
        %v661 = vld [vmem:[%s660] sm:$0xf]
        %v662 = vld [vmem:[%s660 + $0x4] sm:$0xf]
        %v663 = vld [vmem:[%s660 + $0x8] sm:$0xf]
        %v664 = vld [vmem:[%s660 + $0xc] sm:$0xf]
        %s665 = scalar_lea.vmem [#allocation7], 2
        %v666 = vld [vmem:[%s665] sm:$0x1]
        %v668 = vlaneseq
        %v669 = vshrl.u32 %v668, 7
        %v670 = vsub.s32 0, %v669
        %v671 = vrot.slane %v666, %v670
        %v677 = vunpack.c.l.b16 %v661
        %v678 = vunpack.c.l.b16 %v662
        %v679 = vunpack.c.l.b16 %v663
        %v680 = vunpack.c.l.b16 %v664
        %v681 = vpack.c.b16 %v678, %v677
        %v682 = vpack.c.b16 %v680, %v679
        %685 = vmatprep.subr.bf16.mxu0 0
        %686 = vmatpush1.bf16.msra.mxu0 %v681
        %687 = vmatprep.subr.bf16.mxu0 0
        %688 = vmatpush1.bf16.msra.mxu0 %v682
        %689 = vmatprep.subr.bf16.mxu0 0
        %690 = vmatpush1.bf16.msra.mxu0 0
        %691 = vmatprep.subr.bf16.mxu0 0
        %692 = vmatpush1.bf16.msra.mxu0 0
        %693 = vmatprep.subr.bf16.mxu0 0
        %694 = vmatpush1.bf16.msra.mxu0 0
        %695 = vmatprep.subr.bf16.mxu0 0
        %696 = vmatpush1.bf16.msra.mxu0 0
        %697 = vmatprep.subr.bf16.mxu0 0
        %698 = vmatpush1.bf16.msra.mxu0 0
        %699 = vmatprep.subr.bf16.mxu0 0
        %700 = vmatpush1.bf16.msra.mxu0 0
        %701 = vmatprep.subr.bf16.mxu0 0
        %702 = vmatpush1.bf16.msra.mxu0 0
        %703 = vmatprep.subr.bf16.mxu0 0
        %704 = vmatpush1.bf16.msra.mxu0 0
        %705 = vmatprep.subr.bf16.mxu0 0
        %706 = vmatpush1.bf16.msra.mxu0 0
        %707 = vmatprep.subr.bf16.mxu0 0
        %708 = vmatpush1.bf16.msra.mxu0 0
        %709 = vmatprep.subr.bf16.mxu0 0
        %710 = vmatpush1.bf16.msra.mxu0 0
        %711 = vmatprep.subr.bf16.mxu0 0
        %712 = vmatpush1.bf16.msra.mxu0 0
        %713 = vmatprep.subr.bf16.mxu0 0
        %714 = vmatpush1.bf16.msra.mxu0 0
        %715 = vmatprep.subr.bf16.mxu0 0
        %716 = vmatpush1.bf16.msra.mxu0 0
        %717 = vmatprep.mubr.bf16.mxu0 0
        %718 = vmatmul.mubr.bf16.gmra.mrb[0].mxu0 %v553
        %v719 = vpop.f32.mrb[0].mxu0
        %v720 = vadd.f32 %v671, %v719
        %v721 = vpop.f32.mrb[0].mxu0
        %v722 = vpop.f32.mrb[0].mxu0
        %v723 = vpop.f32.mrb[0].mxu0
        %724 = vdwg.mxu0
        %s725 = scalar_lea.vmem %s2, 48
        %v726 = vld [vmem:[%s725] sm:$0xf]
        %v727 = vld [vmem:[%s725 + $0x4] sm:$0xf]
        %v728 = vld [vmem:[%s725 + $0x8] sm:$0xf]
        %v729 = vld [vmem:[%s725 + $0xc] sm:$0xf]
        %s730 = scalar_lea.vmem [#allocation7], 3
        %v731 = vld [vmem:[%s730] sm:$0x1]
        %v733 = vlaneseq
        %v734 = vshrl.u32 %v733, 7
        %v735 = vsub.s32 0, %v734
        %v736 = vrot.slane %v731, %v735
        %v742 = vunpack.c.l.b16 %v726
        %v743 = vunpack.c.l.b16 %v727
        %v744 = vunpack.c.l.b16 %v728
        %v745 = vunpack.c.l.b16 %v729
        %v746 = vpack.c.b16 %v743, %v742
        %v747 = vpack.c.b16 %v745, %v744
        %750 = vmatprep.subr.bf16.mxu0 0
        %751 = vmatpush1.bf16.msra.mxu0 %v746
        %752 = vmatprep.subr.bf16.mxu0 0
        %753 = vmatpush1.bf16.msra.mxu0 %v747
        %754 = vmatprep.subr.bf16.mxu0 0
        %755 = vmatpush1.bf16.msra.mxu0 0
        %756 = vmatprep.subr.bf16.mxu0 0
        %757 = vmatpush1.bf16.msra.mxu0 0
        %758 = vmatprep.subr.bf16.mxu0 0
        %759 = vmatpush1.bf16.msra.mxu0 0
        %760 = vmatprep.subr.bf16.mxu0 0
        %761 = vmatpush1.bf16.msra.mxu0 0
        %762 = vmatprep.subr.bf16.mxu0 0
        %763 = vmatpush1.bf16.msra.mxu0 0
        %764 = vmatprep.subr.bf16.mxu0 0
        %765 = vmatpush1.bf16.msra.mxu0 0
        %766 = vmatprep.subr.bf16.mxu0 0
        %767 = vmatpush1.bf16.msra.mxu0 0
        %768 = vmatprep.subr.bf16.mxu0 0
        %769 = vmatpush1.bf16.msra.mxu0 0
        %770 = vmatprep.subr.bf16.mxu0 0
        %771 = vmatpush1.bf16.msra.mxu0 0
        %772 = vmatprep.subr.bf16.mxu0 0
        %773 = vmatpush1.bf16.msra.mxu0 0
        %774 = vmatprep.subr.bf16.mxu0 0
        %775 = vmatpush1.bf16.msra.mxu0 0
        %776 = vmatprep.subr.bf16.mxu0 0
        %777 = vmatpush1.bf16.msra.mxu0 0
        %778 = vmatprep.subr.bf16.mxu0 0
        %779 = vmatpush1.bf16.msra.mxu0 0
        %780 = vmatprep.subr.bf16.mxu0 0
        %781 = vmatpush1.bf16.msra.mxu0 0
        %782 = vmatprep.mubr.bf16.mxu0 0
        %783 = vmatmul.mubr.bf16.gmra.mrb[0].mxu0 %v553
        %v784 = vpop.f32.mrb[0].mxu0
        %v785 = vadd.f32 %v736, %v784
        %v786 = vpop.f32.mrb[0].mxu0
        %v787 = vpop.f32.mrb[0].mxu0
        %v788 = vpop.f32.mrb[0].mxu0
        %789 = vdwg.mxu0
        %s790 = scalar_lea.vmem %s2, 64
        %v791 = vld [vmem:[%s790] sm:$0xf]
        %v792 = vld [vmem:[%s790 + $0x4] sm:$0xf]
        %v793 = vld [vmem:[%s790 + $0x8] sm:$0xf]
        %v794 = vld [vmem:[%s790 + $0xc] sm:$0xf]
        %s795 = scalar_lea.vmem [#allocation7], 4
        %v796 = vld [vmem:[%s795] sm:$0x1]
        %v798 = vlaneseq
        %v799 = vshrl.u32 %v798, 7
        %v800 = vsub.s32 0, %v799
        %v801 = vrot.slane %v796, %v800
        %v807 = vunpack.c.l.b16 %v791
        %v808 = vunpack.c.l.b16 %v792
        %v809 = vunpack.c.l.b16 %v793
        %v810 = vunpack.c.l.b16 %v794
        %v811 = vpack.c.b16 %v808, %v807
        %v812 = vpack.c.b16 %v810, %v809
        %815 = vmatprep.subr.bf16.mxu0 0
        %816 = vmatpush1.bf16.msra.mxu0 %v811
        %817 = vmatprep.subr.bf16.mxu0 0
        %818 = vmatpush1.bf16.msra.mxu0 %v812
        %819 = vmatprep.subr.bf16.mxu0 0
        %820 = vmatpush1.bf16.msra.mxu0 0
        %821 = vmatprep.subr.bf16.mxu0 0
        %822 = vmatpush1.bf16.msra.mxu0 0
        %823 = vmatprep.subr.bf16.mxu0 0
        %824 = vmatpush1.bf16.msra.mxu0 0
        %825 = vmatprep.subr.bf16.mxu0 0
        %826 = vmatpush1.bf16.msra.mxu0 0
        %827 = vmatprep.subr.bf16.mxu0 0
        %828 = vmatpush1.bf16.msra.mxu0 0
        %829 = vmatprep.subr.bf16.mxu0 0
        %830 = vmatpush1.bf16.msra.mxu0 0
        %831 = vmatprep.subr.bf16.mxu0 0
        %832 = vmatpush1.bf16.msra.mxu0 0
        %833 = vmatprep.subr.bf16.mxu0 0
        %834 = vmatpush1.bf16.msra.mxu0 0
        %835 = vmatprep.subr.bf16.mxu0 0
        %836 = vmatpush1.bf16.msra.mxu0 0
        %837 = vmatprep.subr.bf16.mxu0 0
        %838 = vmatpush1.bf16.msra.mxu0 0
        %839 = vmatprep.subr.bf16.mxu0 0
        %840 = vmatpush1.bf16.msra.mxu0 0
        %841 = vmatprep.subr.bf16.mxu0 0
        %842 = vmatpush1.bf16.msra.mxu0 0
        %843 = vmatprep.subr.bf16.mxu0 0
        %844 = vmatpush1.bf16.msra.mxu0 0
        %845 = vmatprep.subr.bf16.mxu0 0
        %846 = vmatpush1.bf16.msra.mxu0 0
        %847 = vmatprep.mubr.bf16.mxu0 0
        %848 = vmatmul.mubr.bf16.gmra.mrb[0].mxu0 %v553
        %v849 = vpop.f32.mrb[0].mxu0
        %v850 = vadd.f32 %v801, %v849
        %v851 = vpop.f32.mrb[0].mxu0
        %v852 = vpop.f32.mrb[0].mxu0
        %v853 = vpop.f32.mrb[0].mxu0
        %854 = vdwg.mxu0
        %s855 = scalar_lea.vmem %s2, 80
        %v856 = vld [vmem:[%s855] sm:$0xf]
        %v857 = vld [vmem:[%s855 + $0x4] sm:$0xf]
        %v858 = vld [vmem:[%s855 + $0x8] sm:$0xf]
        %v859 = vld [vmem:[%s855 + $0xc] sm:$0xf]
        %s860 = scalar_lea.vmem [#allocation7], 5
        %v861 = vld [vmem:[%s860] sm:$0x1]
        %v863 = vlaneseq
        %v864 = vshrl.u32 %v863, 7
        %v865 = vsub.s32 0, %v864
        %v866 = vrot.slane %v861, %v865
        %v872 = vunpack.c.l.b16 %v856
        %v873 = vunpack.c.l.b16 %v857
        %v874 = vunpack.c.l.b16 %v858
        %v875 = vunpack.c.l.b16 %v859
        %v876 = vpack.c.b16 %v873, %v872
        %v877 = vpack.c.b16 %v875, %v874
        %880 = vmatprep.subr.bf16.mxu0 0
        %881 = vmatpush1.bf16.msra.mxu0 %v876
        %882 = vmatprep.subr.bf16.mxu0 0
        %883 = vmatpush1.bf16.msra.mxu0 %v877
        %884 = vmatprep.subr.bf16.mxu0 0
        %885 = vmatpush1.bf16.msra.mxu0 0
        %886 = vmatprep.subr.bf16.mxu0 0
        %887 = vmatpush1.bf16.msra.mxu0 0
        %888 = vmatprep.subr.bf16.mxu0 0
        %889 = vmatpush1.bf16.msra.mxu0 0
        %890 = vmatprep.subr.bf16.mxu0 0
        %891 = vmatpush1.bf16.msra.mxu0 0
        %892 = vmatprep.subr.bf16.mxu0 0
        %893 = vmatpush1.bf16.msra.mxu0 0
        %894 = vmatprep.subr.bf16.mxu0 0
        %895 = vmatpush1.bf16.msra.mxu0 0
        %896 = vmatprep.subr.bf16.mxu0 0
        %897 = vmatpush1.bf16.msra.mxu0 0
        %898 = vmatprep.subr.bf16.mxu0 0
        %899 = vmatpush1.bf16.msra.mxu0 0
        %900 = vmatprep.subr.bf16.mxu0 0
        %901 = vmatpush1.bf16.msra.mxu0 0
        %902 = vmatprep.subr.bf16.mxu0 0
        %903 = vmatpush1.bf16.msra.mxu0 0
        %904 = vmatprep.subr.bf16.mxu0 0
        %905 = vmatpush1.bf16.msra.mxu0 0
        %906 = vmatprep.subr.bf16.mxu0 0
        %907 = vmatpush1.bf16.msra.mxu0 0
        %908 = vmatprep.subr.bf16.mxu0 0
        %909 = vmatpush1.bf16.msra.mxu0 0
        %910 = vmatprep.subr.bf16.mxu0 0
        %911 = vmatpush1.bf16.msra.mxu0 0
        %912 = vmatprep.mubr.bf16.mxu0 0
        %913 = vmatmul.mubr.bf16.gmra.mrb[0].mxu0 %v553
        %v914 = vpop.f32.mrb[0].mxu0
        %v915 = vadd.f32 %v866, %v914
        %v916 = vpop.f32.mrb[0].mxu0
        %v917 = vpop.f32.mrb[0].mxu0
        %v918 = vpop.f32.mrb[0].mxu0
        %919 = vdwg.mxu0
        %v920 = vsel %vm551, %v518, 0.0
        %921 = vadd.xlane.f32.xlu0 %v920
        %v922 = vpop.xlane.xlu0 %921
        %v923 = vrcp.pop 32.0
        %v924 = vmul.f32 %v922, %v923
        %v925 = vsub.f32 %v518, %v924
        %v926 = vmul.f32 %v925, %v925
        %v927 = vsel %vm551, %v926, 0.0
        %928 = vadd.xlane.f32.xlu0 %v927
        %v929 = vpop.xlane.xlu0 %928
        %v930 = vmul.f32 %v929, %v923
        %v931 = vadd.f32 %v930, 1e-06
        %v932 = vrsqrt.pop %v931
        %v933 = vmul.f32 %v925, %v932
        %v934 = vadd.f32 %v655, 1.0
        %v935 = vmul.f32 %v933, %v934
        %v936 = vadd.f32 %v935, %v590
        %937 = vxpose.xlu0.b32.start [1/16] %v936, 128
        %938 = vxpose.xlu0.b32.cont [2/16] 0.0, 128
        %939 = vxpose.xlu0.b32.cont [3/16] 0.0, 128
        %940 = vxpose.xlu0.b32.cont [4/16] 0.0, 128
        %941 = vxpose.xlu0.b32.cont [5/16] 0.0, 128
        %942 = vxpose.xlu0.b32.cont [6/16] 0.0, 128
        %943 = vxpose.xlu0.b32.cont [7/16] 0.0, 128
        %944 = vxpose.xlu0.b32.cont [8/16] 0.0, 128
        %945 = vxpose.xlu0.b32.cont [9/16] 0.0, 128
        %946 = vxpose.xlu0.b32.cont [10/16] 0.0, 128
        %947 = vxpose.xlu0.b32.cont [11/16] 0.0, 128
        %948 = vxpose.xlu0.b32.cont [12/16] 0.0, 128
        %949 = vxpose.xlu0.b32.cont [13/16] 0.0, 128
        %950 = vxpose.xlu0.b32.cont [14/16] 0.0, 128
        %951 = vxpose.xlu0.b32.cont [15/16] 0.0, 128
        %952 = vxpose.xlu0.b32.end [16/16] 0.0, 128
        %v953 = vpop.trf.xlu0
        %v954 = vpop.trf.xlu0
        %v955 = vpop.trf.xlu0
        %v956 = vpop.trf.xlu0
        %v957 = vpop.trf.xlu0
        %v958 = vpop.trf.xlu0
        %v959 = vpop.trf.xlu0
        %v960 = vpop.trf.xlu0
        %v961 = vpop.trf.xlu0
        %v962 = vpop.trf.xlu0
        %v963 = vpop.trf.xlu0
        %v964 = vpop.trf.xlu0
        %v965 = vpop.trf.xlu0
        %v966 = vpop.trf.xlu0
        %v967 = vpop.trf.xlu0
        %v968 = vpop.trf.xlu0
        %v969 = vpack.c.bf16 %v954, %v953
        %v970 = vpack.c.bf16 %v956, %v955
        %v971 = vld [vmem:[%s4] sm:$0xf]
        %v972 = vld [vmem:[%s4 + $0x4] sm:$0xf]
        %v973 = vld [vmem:[%s4 + $0x8] sm:$0xf]
        %v974 = vld [vmem:[%s4 + $0xc] sm:$0xf]
        %v975 = vld [vmem:[%s5] sm:$0xff]
        %v976 = vld [vmem:[%s5 + $0x8] sm:$0xff]
        %v977 = vld [vmem:[%s5 + $0x10] sm:$0xff]
        %v978 = vld [vmem:[%s5 + $0x18] sm:$0xff]
        %980 = vset.pattern.permute.xlu0 0
        %981 = vperm.xlu0 %980, %v975
        %v982 = vpop.permute.xlu0 %981
        %985 = vset.pattern.permute.xlu0 0
        %986 = vperm.xlu0 %985, %v976
        %v987 = vpop.permute.xlu0 %986
        %990 = vset.pattern.permute.xlu0 0
        %991 = vperm.xlu0 %990, %v977
        %v992 = vpop.permute.xlu0 %991
        %995 = vset.pattern.permute.xlu0 0
        %996 = vperm.xlu0 %995, %v978
        %v997 = vpop.permute.xlu0 %996
        %v1003 = vunpack.c.l.b16 %v971
        %v1004 = vunpack.c.l.b16 %v972
        %v1005 = vunpack.c.l.b16 %v973
        %v1006 = vunpack.c.l.b16 %v974
        %v1007 = vpack.c.b16 %v1004, %v1003
        %v1008 = vpack.c.b16 %v1006, %v1005
        %v1010 = vsel %vm551, %v1007, 0
        %v1013 = vsel %vm551, %v1008, 0
        %1015 = vmatprep.subr.bf16.mxu0 0
        %1016 = vmatpush1.bf16.msra.mxu0 %v969
        %1017 = vmatprep.subr.bf16.mxu0 0
        %1018 = vmatpush1.bf16.msra.mxu0 %v970
        %1019 = vmatprep.subr.bf16.mxu0 0
        %1020 = vmatpush1.bf16.msra.mxu0 0
        %1021 = vmatprep.subr.bf16.mxu0 0
        %1022 = vmatpush1.bf16.msra.mxu0 0
        %1023 = vmatprep.subr.bf16.mxu0 0
        %1024 = vmatpush1.bf16.msra.mxu0 0
        %1025 = vmatprep.subr.bf16.mxu0 0
        %1026 = vmatpush1.bf16.msra.mxu0 0
        %1027 = vmatprep.subr.bf16.mxu0 0
        %1028 = vmatpush1.bf16.msra.mxu0 0
        %1029 = vmatprep.subr.bf16.mxu0 0
        %1030 = vmatpush1.bf16.msra.mxu0 0
        %1031 = vmatprep.subr.bf16.mxu0 0
        %1032 = vmatpush1.bf16.msra.mxu0 0
        %1033 = vmatprep.subr.bf16.mxu0 0
        %1034 = vmatpush1.bf16.msra.mxu0 0
        %1035 = vmatprep.subr.bf16.mxu0 0
        %1036 = vmatpush1.bf16.msra.mxu0 0
        %1037 = vmatprep.subr.bf16.mxu0 0
        %1038 = vmatpush1.bf16.msra.mxu0 0
        %1039 = vmatprep.subr.bf16.mxu0 0
        %1040 = vmatpush1.bf16.msra.mxu0 0
        %1041 = vmatprep.subr.bf16.mxu0 0
        %1042 = vmatpush1.bf16.msra.mxu0 0
        %1043 = vmatprep.subr.bf16.mxu0 0
        %1044 = vmatpush1.bf16.msra.mxu0 0
        %1045 = vmatprep.subr.bf16.mxu0 0
        %1046 = vmatpush1.bf16.msra.mxu0 0
        %1047 = vmatprep.mubr.bf16.mxu0 0
        %1048 = vmatmul.mubr.bf16.gmra.mrb[0].mxu0 %v1010
        %v1049 = vpop.f32.mrb[0].mxu0
        %v1050 = vadd.f32 %v982, %v1049
        %v1051 = vpop.f32.mrb[0].mxu0
        %v1052 = vpop.f32.mrb[0].mxu0
        %v1053 = vadd.f32 %v987, %v1052
        %v1054 = vpop.f32.mrb[0].mxu0
        %1055 = vmatprep.mubr.bf16.mxu0 0
        %1056 = vmatmul.mubr.bf16.gmra.mrb[0].mxu0 %v1013
        %v1057 = vpop.f32.mrb[0].mxu0
        %v1058 = vadd.f32 %v992, %v1057
        %v1059 = vpop.f32.mrb[0].mxu0
        %v1060 = vpop.f32.mrb[0].mxu0
        %v1061 = vadd.f32 %v997, %v1060
        %v1062 = vpop.f32.mrb[0].mxu0
        %1063 = vdwg.mxu0
        %v1064 = vmul.f32 %v1050, 0.35355338
        %v1065 = vmul.f32 %v1053, 0.35355338
        %v1066 = vmul.f32 %v1058, 0.35355338
        %v1067 = vmul.f32 %v1061, 0.35355338
        %v1068 = vpack.c.bf16 %v1065, %v1064
        %v1069 = vpack.c.bf16 %v1067, %v1066
        %s1070 = scalar_lea.vmem %s4, 16
        %v1071 = vld [vmem:[%s1070] sm:$0xf]
        %v1072 = vld [vmem:[%s1070 + $0x4] sm:$0xf]
        %v1073 = vld [vmem:[%s1070 + $0x8] sm:$0xf]
        %v1074 = vld [vmem:[%s1070 + $0xc] sm:$0xf]
        %s1075 = scalar_lea.vmem %s5, 32
        %v1076 = vld [vmem:[%s1075] sm:$0xff]
        %v1077 = vld [vmem:[%s1075 + $0x8] sm:$0xff]
        %v1078 = vld [vmem:[%s1075 + $0x10] sm:$0xff]
        %v1079 = vld [vmem:[%s1075 + $0x18] sm:$0xff]
        %1081 = vset.pattern.permute.xlu0 0
        %1082 = vperm.xlu0 %1081, %v1076
        %v1083 = vpop.permute.xlu0 %1082
        %1086 = vset.pattern.permute.xlu0 0
        %1087 = vperm.xlu0 %1086, %v1077
        %v1088 = vpop.permute.xlu0 %1087
        %1091 = vset.pattern.permute.xlu0 0
        %1092 = vperm.xlu0 %1091, %v1078
        %v1093 = vpop.permute.xlu0 %1092
        %1096 = vset.pattern.permute.xlu0 0
        %1097 = vperm.xlu0 %1096, %v1079
        %v1098 = vpop.permute.xlu0 %1097
        %v1104 = vunpack.c.l.b16 %v1071
        %v1105 = vunpack.c.l.b16 %v1072
        %v1106 = vunpack.c.l.b16 %v1073
        %v1107 = vunpack.c.l.b16 %v1074
        %v1108 = vpack.c.b16 %v1105, %v1104
        %v1109 = vpack.c.b16 %v1107, %v1106
        %v1111 = vsel %vm551, %v1108, 0
        %v1114 = vsel %vm551, %v1109, 0
        %1116 = vmatprep.subr.bf16.mxu0 0
        %1117 = vmatpush1.bf16.msra.mxu0 %v969
        %1118 = vmatprep.subr.bf16.mxu0 0
        %1119 = vmatpush1.bf16.msra.mxu0 %v970
        %1120 = vmatprep.subr.bf16.mxu0 0
        %1121 = vmatpush1.bf16.msra.mxu0 0
        %1122 = vmatprep.subr.bf16.mxu0 0
        %1123 = vmatpush1.bf16.msra.mxu0 0
        %1124 = vmatprep.subr.bf16.mxu0 0
        %1125 = vmatpush1.bf16.msra.mxu0 0
        %1126 = vmatprep.subr.bf16.mxu0 0
        %1127 = vmatpush1.bf16.msra.mxu0 0
        %1128 = vmatprep.subr.bf16.mxu0 0
        %1129 = vmatpush1.bf16.msra.mxu0 0
        %1130 = vmatprep.subr.bf16.mxu0 0
        %1131 = vmatpush1.bf16.msra.mxu0 0
        %1132 = vmatprep.subr.bf16.mxu0 0
        %1133 = vmatpush1.bf16.msra.mxu0 0
        %1134 = vmatprep.subr.bf16.mxu0 0
        %1135 = vmatpush1.bf16.msra.mxu0 0
        %1136 = vmatprep.subr.bf16.mxu0 0
        %1137 = vmatpush1.bf16.msra.mxu0 0
        %1138 = vmatprep.subr.bf16.mxu0 0
        %1139 = vmatpush1.bf16.msra.mxu0 0
        %1140 = vmatprep.subr.bf16.mxu0 0
        %1141 = vmatpush1.bf16.msra.mxu0 0
        %1142 = vmatprep.subr.bf16.mxu0 0
        %1143 = vmatpush1.bf16.msra.mxu0 0
        %1144 = vmatprep.subr.bf16.mxu0 0
        %1145 = vmatpush1.bf16.msra.mxu0 0
        %1146 = vmatprep.subr.bf16.mxu0 0
        %1147 = vmatpush1.bf16.msra.mxu0 0
        %1148 = vmatprep.mubr.bf16.mxu0 0
        %1149 = vmatmul.mubr.bf16.gmra.mrb[0].mxu0 %v1111
        %v1150 = vpop.f32.mrb[0].mxu0
        %v1151 = vadd.f32 %v1083, %v1150
        %v1152 = vpop.f32.mrb[0].mxu0
        %v1153 = vpop.f32.mrb[0].mxu0
        %v1154 = vadd.f32 %v1088, %v1153
        %v1155 = vpop.f32.mrb[0].mxu0
        %1156 = vmatprep.mubr.bf16.mxu0 0
        %1157 = vmatmul.mubr.bf16.gmra.mrb[0].mxu0 %v1114
        %v1158 = vpop.f32.mrb[0].mxu0
        %v1159 = vadd.f32 %v1093, %v1158
        %v1160 = vpop.f32.mrb[0].mxu0
        %v1161 = vpop.f32.mrb[0].mxu0
        %v1162 = vadd.f32 %v1098, %v1161
        %v1163 = vpop.f32.mrb[0].mxu0
        %1164 = vdwg.mxu0
        %v1165 = vpack.c.bf16 %v1154, %v1151
        %v1166 = vpack.c.bf16 %v1162, %v1159
        %s1167 = scalar_lea.vmem %s4, 32
        %v1168 = vld [vmem:[%s1167] sm:$0xf]
        %v1169 = vld [vmem:[%s1167 + $0x4] sm:$0xf]
        %v1170 = vld [vmem:[%s1167 + $0x8] sm:$0xf]
        %v1171 = vld [vmem:[%s1167 + $0xc] sm:$0xf]
        %s1172 = scalar_lea.vmem %s5, 64
        %v1173 = vld [vmem:[%s1172] sm:$0xff]
        %v1174 = vld [vmem:[%s1172 + $0x8] sm:$0xff]
        %v1175 = vld [vmem:[%s1172 + $0x10] sm:$0xff]
        %v1176 = vld [vmem:[%s1172 + $0x18] sm:$0xff]
        %1178 = vset.pattern.permute.xlu0 0
        %1179 = vperm.xlu0 %1178, %v1173
        %v1180 = vpop.permute.xlu0 %1179
        %1183 = vset.pattern.permute.xlu0 0
        %1184 = vperm.xlu0 %1183, %v1174
        %v1185 = vpop.permute.xlu0 %1184
        %1188 = vset.pattern.permute.xlu0 0
        %1189 = vperm.xlu0 %1188, %v1175
        %v1190 = vpop.permute.xlu0 %1189
        %1193 = vset.pattern.permute.xlu0 0
        %1194 = vperm.xlu0 %1193, %v1176
        %v1195 = vpop.permute.xlu0 %1194
        %v1201 = vunpack.c.l.b16 %v1168
        %v1202 = vunpack.c.l.b16 %v1169
        %v1203 = vunpack.c.l.b16 %v1170
        %v1204 = vunpack.c.l.b16 %v1171
        %v1205 = vpack.c.b16 %v1202, %v1201
        %v1206 = vpack.c.b16 %v1204, %v1203
        %v1208 = vsel %vm551, %v1205, 0
        %v1211 = vsel %vm551, %v1206, 0
        %1213 = vmatprep.subr.bf16.mxu0 0
        %1214 = vmatpush1.bf16.msra.mxu0 %v969
        %1215 = vmatprep.subr.bf16.mxu0 0
        %1216 = vmatpush1.bf16.msra.mxu0 %v970
        %1217 = vmatprep.subr.bf16.mxu0 0
        %1218 = vmatpush1.bf16.msra.mxu0 0
        %1219 = vmatprep.subr.bf16.mxu0 0
        %1220 = vmatpush1.bf16.msra.mxu0 0
        %1221 = vmatprep.subr.bf16.mxu0 0
        %1222 = vmatpush1.bf16.msra.mxu0 0
        %1223 = vmatprep.subr.bf16.mxu0 0
        %1224 = vmatpush1.bf16.msra.mxu0 0
        %1225 = vmatprep.subr.bf16.mxu0 0
        %1226 = vmatpush1.bf16.msra.mxu0 0
        %1227 = vmatprep.subr.bf16.mxu0 0
        %1228 = vmatpush1.bf16.msra.mxu0 0
        %1229 = vmatprep.subr.bf16.mxu0 0
        %1230 = vmatpush1.bf16.msra.mxu0 0
        %1231 = vmatprep.subr.bf16.mxu0 0
        %1232 = vmatpush1.bf16.msra.mxu0 0
        %1233 = vmatprep.subr.bf16.mxu0 0
        %1234 = vmatpush1.bf16.msra.mxu0 0
        %1235 = vmatprep.subr.bf16.mxu0 0
        %1236 = vmatpush1.bf16.msra.mxu0 0
        %1237 = vmatprep.subr.bf16.mxu0 0
        %1238 = vmatpush1.bf16.msra.mxu0 0
        %1239 = vmatprep.subr.bf16.mxu0 0
        %1240 = vmatpush1.bf16.msra.mxu0 0
        %1241 = vmatprep.subr.bf16.mxu0 0
        %1242 = vmatpush1.bf16.msra.mxu0 0
        %1243 = vmatprep.subr.bf16.mxu0 0
        %1244 = vmatpush1.bf16.msra.mxu0 0
        %1245 = vmatprep.mubr.bf16.mxu0 0
        %1246 = vmatmul.mubr.bf16.gmra.mrb[0].mxu0 %v1208
        %v1247 = vpop.f32.mrb[0].mxu0
        %v1248 = vadd.f32 %v1180, %v1247
        %v1249 = vpop.f32.mrb[0].mxu0
        %v1250 = vpop.f32.mrb[0].mxu0
        %v1251 = vadd.f32 %v1185, %v1250
        %v1252 = vpop.f32.mrb[0].mxu0
        %1253 = vmatprep.mubr.bf16.mxu0 0
        %1254 = vmatmul.mubr.bf16.gmra.mrb[0].mxu0 %v1211
        %v1255 = vpop.f32.mrb[0].mxu0
        %v1256 = vadd.f32 %v1190, %v1255
        %v1257 = vpop.f32.mrb[0].mxu0
        %v1258 = vpop.f32.mrb[0].mxu0
        %v1259 = vadd.f32 %v1195, %v1258
        %v1260 = vpop.f32.mrb[0].mxu0
        %1261 = vdwg.mxu0
        %v1262 = vpack.c.bf16 %v1251, %v1248
        %v1263 = vpack.c.bf16 %v1259, %v1256
        %1264 = vxpose.xlu0.c.b16.start [1/8] %v1068, 128
        %1265 = vxpose.xlu0.c.b16.cont [2/8] 0, 128
        %1266 = vxpose.xlu0.c.b16.cont [3/8] 0, 128
        %1267 = vxpose.xlu0.c.b16.cont [4/8] 0, 128
        %1268 = vxpose.xlu0.c.b16.cont [5/8] 0, 128
        %1269 = vxpose.xlu0.c.b16.cont [6/8] 0, 128
        %1270 = vxpose.xlu0.c.b16.cont [7/8] 0, 128
        %1271 = vxpose.xlu0.c.b16.end [8/8] 0, 128
        %v1272 = vpop.trf.xlu0
        %v1273 = vpop.trf.xlu0
        %v1274 = vpop.trf.xlu0
        %v1275 = vpop.trf.xlu0
        %v1276 = vpop.trf.xlu0
        %v1277 = vpop.trf.xlu0
        %v1278 = vpop.trf.xlu0
        %v1279 = vpop.trf.xlu0
        %vm1280 = vcmask 64512
        %v1282 = vsel %vm1280, %v1272, 0
        %vm1284 = vcmask 1043456
        %v1286 = vsel %vm1284, %v1165, 0
        %1288 = vmatprep.subr.bf16.mxu0 0
        %1289 = vmatpush1.bf16.msra.mxu0 %v1286
        %1290 = vmatprep.subr.bf16.mxu0 0
        %1291 = vmatpush1.bf16.msra.mxu0 0
        %1292 = vmatprep.subr.bf16.mxu0 0
        %1293 = vmatpush1.bf16.msra.mxu0 0
        %1294 = vmatprep.subr.bf16.mxu0 0
        %1295 = vmatpush1.bf16.msra.mxu0 0
        %1296 = vmatprep.subr.bf16.mxu0 0
        %1297 = vmatpush1.bf16.msra.mxu0 0
        %1298 = vmatprep.subr.bf16.mxu0 0
        %1299 = vmatpush1.bf16.msra.mxu0 0
        %1300 = vmatprep.subr.bf16.mxu0 0
        %1301 = vmatpush1.bf16.msra.mxu0 0
        %1302 = vmatprep.subr.bf16.mxu0 0
        %1303 = vmatpush1.bf16.msra.mxu0 0
        %1304 = vmatprep.subr.bf16.mxu0 0
        %1305 = vmatpush1.bf16.msra.mxu0 0
        %1306 = vmatprep.subr.bf16.mxu0 0
        %1307 = vmatpush1.bf16.msra.mxu0 0
        %1308 = vmatprep.subr.bf16.mxu0 0
        %1309 = vmatpush1.bf16.msra.mxu0 0
        %1310 = vmatprep.subr.bf16.mxu0 0
        %1311 = vmatpush1.bf16.msra.mxu0 0
        %1312 = vmatprep.subr.bf16.mxu0 0
        %1313 = vmatpush1.bf16.msra.mxu0 0
        %1314 = vmatprep.subr.bf16.mxu0 0
        %1315 = vmatpush1.bf16.msra.mxu0 0
        %1316 = vmatprep.subr.bf16.mxu0 0
        %1317 = vmatpush1.bf16.msra.mxu0 0
        %1318 = vmatprep.subr.bf16.mxu0 0
        %1319 = vmatpush1.bf16.msra.mxu0 0
        %1320 = vmatprep.mubr.bf16.mxu0 0
        %1321 = vmatmul.mubr.bf16.gmra.mrb[0].mxu0 %v1282
        %v1322 = vpop.f32.mrb[0].mxu0
        %v1323 = vadd.f32 0.0, %v1322
        %v1324 = vpop.f32.mrb[0].mxu0
        %v1325 = vpop.f32.mrb[0].mxu0
        %v1326 = vpop.f32.mrb[0].mxu0
        %1327 = vdwg.mxu0
        %v1328 = vsel %vm1280, %v1323, -inf
        %1329 = vmax.xlane.f32.xlu0 %v1328
        %v1330 = vpop.xlane.xlu0 %1329
        %v1331 = vsub.f32 %v1323, %v1330
        %v1332 = vmul.f32 %v1331, 1.442695
        %v1333 = vpow.pop %v1332
        %v1334 = vsel %vm1280, %v1333, 0.0
        %1335 = vadd.xlane.f32.xlu0 %v1334
        %v1336 = vpop.xlane.xlu0 %1335
        %v1337 = vrcp.pop %v1336
        %v1338 = vmul.f32 %v1333, %v1337
        %v1339 = vpack.c.bf16 %v1338, %v1338
        %v1341 = vsel %vm1280, %v1339, 0
        %v1344 = vsel %vm1280, %v1262, 0
        %1346 = vmatprep.subr.bf16.mxu0 0
        %1347 = vmatpush1.bf16.xpose.msra.mxu0 %v1344
        %1348 = vmatprep.subr.bf16.mxu0 0
        %1349 = vmatpush1.bf16.xpose.msra.mxu0 0
        %1350 = vmatprep.subr.bf16.mxu0 0
        %1351 = vmatpush1.bf16.xpose.msra.mxu0 0
        %1352 = vmatprep.subr.bf16.mxu0 0
        %1353 = vmatpush1.bf16.xpose.msra.mxu0 0
        %1354 = vmatprep.subr.bf16.mxu0 0
        %1355 = vmatpush1.bf16.xpose.msra.mxu0 0
        %1356 = vmatprep.subr.bf16.mxu0 0
        %1357 = vmatpush1.bf16.xpose.msra.mxu0 0
        %1358 = vmatprep.subr.bf16.mxu0 0
        %1359 = vmatpush1.bf16.xpose.msra.mxu0 0
        %1360 = vmatprep.subr.bf16.mxu0 0
        %1361 = vmatpush1.bf16.xpose.msra.mxu0 0
        %1362 = vmatprep.subr.bf16.mxu0 0
        %1363 = vmatpush1.bf16.xpose.msra.mxu0 0
        %1364 = vmatprep.subr.bf16.mxu0 0
        %1365 = vmatpush1.bf16.xpose.msra.mxu0 0
        %1366 = vmatprep.subr.bf16.mxu0 0
        %1367 = vmatpush1.bf16.xpose.msra.mxu0 0
        %1368 = vmatprep.subr.bf16.mxu0 0
        %1369 = vmatpush1.bf16.xpose.msra.mxu0 0
        %1370 = vmatprep.subr.bf16.mxu0 0
        %1371 = vmatpush1.bf16.xpose.msra.mxu0 0
        %1372 = vmatprep.subr.bf16.mxu0 0
        %1373 = vmatpush1.bf16.xpose.msra.mxu0 0
        %1374 = vmatprep.subr.bf16.mxu0 0
        %1375 = vmatpush1.bf16.xpose.msra.mxu0 0
        %1376 = vmatprep.subr.bf16.mxu0 0
        %1377 = vmatpush1.bf16.xpose.msra.mxu0 0
        %1378 = vmatprep.mubr.bf16.mxu0 0
        %1379 = vmatmul.mubr.bf16.gmra.mrb[0].mxu0 %v1341
        %v1380 = vpop.f32.mrb[0].mxu0
        %v1381 = vadd.f32 0.0, %v1380
        %v1382 = vpop.f32.mrb[0].mxu0
        %v1383 = vpop.f32.mrb[0].mxu0
        %v1384 = vpop.f32.mrb[0].mxu0
        %1385 = vdwg.mxu0
        %v1386 = vpack.c.bf16 %v1381, %v1381
        %v1387 = vld [vmem:[%s6] sm:$0xf]
        %v1389 = vrot.slane %v1068, 4
        %1391 = vxpose.xlu0.c.b16.start [1/8] %v1389, 128
        %1392 = vxpose.xlu0.c.b16.cont [2/8] 0, 128
        %1393 = vxpose.xlu0.c.b16.cont [3/8] 0, 128
        %1394 = vxpose.xlu0.c.b16.cont [4/8] 0, 128
        %1395 = vxpose.xlu0.c.b16.cont [5/8] 0, 128
        %1396 = vxpose.xlu0.c.b16.cont [6/8] 0, 128
        %1397 = vxpose.xlu0.c.b16.cont [7/8] 0, 128
        %1398 = vxpose.xlu0.c.b16.end [8/8] 0, 128
        %v1399 = vpop.trf.xlu0
        %v1400 = vpop.trf.xlu0
        %v1401 = vpop.trf.xlu0
        %v1402 = vpop.trf.xlu0
        %v1403 = vpop.trf.xlu0
        %v1404 = vpop.trf.xlu0
        %v1405 = vpop.trf.xlu0
        %v1406 = vpop.trf.xlu0
        %v1408 = vrot.slane %v1165, 4
        %v1410 = vsel %vm1280, %v1399, 0
        %v1413 = vsel %vm1284, %v1408, 0
        %1415 = vmatprep.subr.bf16.mxu0 0
        %1416 = vmatpush1.bf16.msra.mxu0 %v1413
        %1417 = vmatprep.subr.bf16.mxu0 0
        %1418 = vmatpush1.bf16.msra.mxu0 0
        %1419 = vmatprep.subr.bf16.mxu0 0
        %1420 = vmatpush1.bf16.msra.mxu0 0
        %1421 = vmatprep.subr.bf16.mxu0 0
        %1422 = vmatpush1.bf16.msra.mxu0 0
        %1423 = vmatprep.subr.bf16.mxu0 0
        %1424 = vmatpush1.bf16.msra.mxu0 0
        %1425 = vmatprep.subr.bf16.mxu0 0
        %1426 = vmatpush1.bf16.msra.mxu0 0
        %1427 = vmatprep.subr.bf16.mxu0 0
        %1428 = vmatpush1.bf16.msra.mxu0 0
        %1429 = vmatprep.subr.bf16.mxu0 0
        %1430 = vmatpush1.bf16.msra.mxu0 0
        %1431 = vmatprep.subr.bf16.mxu0 0
        %1432 = vmatpush1.bf16.msra.mxu0 0
        %1433 = vmatprep.subr.bf16.mxu0 0
        %1434 = vmatpush1.bf16.msra.mxu0 0
        %1435 = vmatprep.subr.bf16.mxu0 0
        %1436 = vmatpush1.bf16.msra.mxu0 0
        %1437 = vmatprep.subr.bf16.mxu0 0
        %1438 = vmatpush1.bf16.msra.mxu0 0
        %1439 = vmatprep.subr.bf16.mxu0 0
        %1440 = vmatpush1.bf16.msra.mxu0 0
        %1441 = vmatprep.subr.bf16.mxu0 0
        %1442 = vmatpush1.bf16.msra.mxu0 0
        %1443 = vmatprep.subr.bf16.mxu0 0
        %1444 = vmatpush1.bf16.msra.mxu0 0
        %1445 = vmatprep.subr.bf16.mxu0 0
        %1446 = vmatpush1.bf16.msra.mxu0 0
        %1447 = vmatprep.mubr.bf16.mxu0 0
        %1448 = vmatmul.mubr.bf16.gmra.mrb[0].mxu0 %v1410
        %v1449 = vpop.f32.mrb[0].mxu0
        %v1450 = vadd.f32 0.0, %v1449
        %v1451 = vpop.f32.mrb[0].mxu0
        %v1452 = vpop.f32.mrb[0].mxu0
        %v1453 = vpop.f32.mrb[0].mxu0
        %1454 = vdwg.mxu0
        %v1455 = vsel %vm1280, %v1450, -inf
        %1456 = vmax.xlane.f32.xlu0 %v1455
        %v1457 = vpop.xlane.xlu0 %1456
        %v1458 = vsub.f32 %v1450, %v1457
        %v1459 = vmul.f32 %v1458, 1.442695
        %v1460 = vpow.pop %v1459
        %v1461 = vsel %vm1280, %v1460, 0.0
        %1462 = vadd.xlane.f32.xlu0 %v1461
        %v1463 = vpop.xlane.xlu0 %1462
        %v1464 = vrcp.pop %v1463
        %v1465 = vmul.f32 %v1460, %v1464
        %v1466 = vpack.c.bf16 %v1465, %v1465
        %v1468 = vrot.slane %v1262, 4
        %v1470 = vsel %vm1280, %v1466, 0
        %v1473 = vsel %vm1280, %v1468, 0
        %1475 = vmatprep.subr.bf16.mxu0 0
        %1476 = vmatpush1.bf16.xpose.msra.mxu0 %v1473
        %1477 = vmatprep.subr.bf16.mxu0 0
        %1478 = vmatpush1.bf16.xpose.msra.mxu0 0
        %1479 = vmatprep.subr.bf16.mxu0 0
        %1480 = vmatpush1.bf16.xpose.msra.mxu0 0
        %1481 = vmatprep.subr.bf16.mxu0 0
        %1482 = vmatpush1.bf16.xpose.msra.mxu0 0
        %1483 = vmatprep.subr.bf16.mxu0 0
        %1484 = vmatpush1.bf16.xpose.msra.mxu0 0
        %1485 = vmatprep.subr.bf16.mxu0 0
        %1486 = vmatpush1.bf16.xpose.msra.mxu0 0
        %1487 = vmatprep.subr.bf16.mxu0 0
        %1488 = vmatpush1.bf16.xpose.msra.mxu0 0
        %1489 = vmatprep.subr.bf16.mxu0 0
        %1490 = vmatpush1.bf16.xpose.msra.mxu0 0
        %1491 = vmatprep.subr.bf16.mxu0 0
        %1492 = vmatpush1.bf16.xpose.msra.mxu0 0
        %1493 = vmatprep.subr.bf16.mxu0 0
        %1494 = vmatpush1.bf16.xpose.msra.mxu0 0
        %1495 = vmatprep.subr.bf16.mxu0 0
        %1496 = vmatpush1.bf16.xpose.msra.mxu0 0
        %1497 = vmatprep.subr.bf16.mxu0 0
        %1498 = vmatpush1.bf16.xpose.msra.mxu0 0
        %1499 = vmatprep.subr.bf16.mxu0 0
        %1500 = vmatpush1.bf16.xpose.msra.mxu0 0
        %1501 = vmatprep.subr.bf16.mxu0 0
        %1502 = vmatpush1.bf16.xpose.msra.mxu0 0
        %1503 = vmatprep.subr.bf16.mxu0 0
        %1504 = vmatpush1.bf16.xpose.msra.mxu0 0
        %1505 = vmatprep.subr.bf16.mxu0 0
        %1506 = vmatpush1.bf16.xpose.msra.mxu0 0
        %1507 = vmatprep.mubr.bf16.mxu0 0
        %1508 = vmatmul.mubr.bf16.gmra.mrb[0].mxu0 %v1470
        %v1509 = vpop.f32.mrb[0].mxu0
        %v1510 = vadd.f32 0.0, %v1509
        %v1511 = vpop.f32.mrb[0].mxu0
        %v1512 = vpop.f32.mrb[0].mxu0
        %v1513 = vpop.f32.mrb[0].mxu0
        %1514 = vdwg.mxu0
        %v1515 = vpack.c.bf16 %v1510, %v1510
        %s1516 = scalar_lea.vmem %s6, 4
        %v1517 = vld [vmem:[%s1516] sm:$0xf]
        %v1519 = vsel %vm1280, %v1515, 0
        %v1522 = vsel %vm1284, %v1517, 0
        %1524 = vmatprep.subr.bf16.mxu0 0
        %1525 = vmatpush1.bf16.msra.mxu0 %v1522
        %1526 = vmatprep.subr.bf16.mxu0 0
        %1527 = vmatpush1.bf16.msra.mxu0 0
        %1528 = vmatprep.subr.bf16.mxu0 0
        %1529 = vmatpush1.bf16.msra.mxu0 0
        %1530 = vmatprep.subr.bf16.mxu0 0
        %1531 = vmatpush1.bf16.msra.mxu0 0
        %1532 = vmatprep.subr.bf16.mxu0 0
        %1533 = vmatpush1.bf16.msra.mxu0 0
        %1534 = vmatprep.subr.bf16.mxu0 0
        %1535 = vmatpush1.bf16.msra.mxu0 0
        %1536 = vmatprep.subr.bf16.mxu0 0
        %1537 = vmatpush1.bf16.msra.mxu0 0
        %1538 = vmatprep.subr.bf16.mxu0 0
        %1539 = vmatpush1.bf16.msra.mxu0 0
        %1540 = vmatprep.subr.bf16.mxu0 0
        %1541 = vmatpush1.bf16.msra.mxu0 0
        %1542 = vmatprep.subr.bf16.mxu0 0
        %1543 = vmatpush1.bf16.msra.mxu0 0
        %1544 = vmatprep.subr.bf16.mxu0 0
        %1545 = vmatpush1.bf16.msra.mxu0 0
        %1546 = vmatprep.subr.bf16.mxu0 0
        %1547 = vmatpush1.bf16.msra.mxu0 0
        %1548 = vmatprep.subr.bf16.mxu0 0
        %1549 = vmatpush1.bf16.msra.mxu0 0
        %1550 = vmatprep.subr.bf16.mxu0 0
        %1551 = vmatpush1.bf16.msra.mxu0 0
        %1552 = vmatprep.subr.bf16.mxu0 0
        %1553 = vmatpush1.bf16.msra.mxu0 0
        %1554 = vmatprep.subr.bf16.mxu0 0
        %1555 = vmatpush1.bf16.msra.mxu0 0
        %1556 = vmatprep.mubr.bf16.mxu0 0
        %1557 = vmatmul.mubr.bf16.gmra.mrb[0].mxu0 %v1519
        %v1558 = vpop.f32.mrb[0].mxu0
        %v1559 = vadd.f32 0.0, %v1558
        %v1560 = vpop.f32.mrb[0].mxu0
        %v1561 = vpop.f32.mrb[0].mxu0
        %v1562 = vpop.f32.mrb[0].mxu0
        %1563 = vdwg.mxu0
        %v1565 = vsel %vm1280, %v1386, 0
        %v1568 = vsel %vm1284, %v1387, 0
        %1570 = vmatprep.subr.bf16.mxu0 0
        %1571 = vmatpush1.bf16.msra.mxu0 %v1568
        %1572 = vmatprep.subr.bf16.mxu0 0
        %1573 = vmatpush1.bf16.msra.mxu0 0
        %1574 = vmatprep.subr.bf16.mxu0 0
        %1575 = vmatpush1.bf16.msra.mxu0 0
        %1576 = vmatprep.subr.bf16.mxu0 0
        %1577 = vmatpush1.bf16.msra.mxu0 0
        %1578 = vmatprep.subr.bf16.mxu0 0
        %1579 = vmatpush1.bf16.msra.mxu0 0
        %1580 = vmatprep.subr.bf16.mxu0 0
        %1581 = vmatpush1.bf16.msra.mxu0 0
        %1582 = vmatprep.subr.bf16.mxu0 0
        %1583 = vmatpush1.bf16.msra.mxu0 0
        %1584 = vmatprep.subr.bf16.mxu0 0
        %1585 = vmatpush1.bf16.msra.mxu0 0
        %1586 = vmatprep.subr.bf16.mxu0 0
        %1587 = vmatpush1.bf16.msra.mxu0 0
        %1588 = vmatprep.subr.bf16.mxu0 0
        %1589 = vmatpush1.bf16.msra.mxu0 0
        %1590 = vmatprep.subr.bf16.mxu0 0
        %1591 = vmatpush1.bf16.msra.mxu0 0
        %1592 = vmatprep.subr.bf16.mxu0 0
        %1593 = vmatpush1.bf16.msra.mxu0 0
        %1594 = vmatprep.subr.bf16.mxu0 0
        %1595 = vmatpush1.bf16.msra.mxu0 0
        %1596 = vmatprep.subr.bf16.mxu0 0
        %1597 = vmatpush1.bf16.msra.mxu0 0
        %1598 = vmatprep.subr.bf16.mxu0 0
        %1599 = vmatpush1.bf16.msra.mxu0 0
        %1600 = vmatprep.subr.bf16.mxu0 0
        %1601 = vmatpush1.bf16.msra.mxu0 0
        %1602 = vmatprep.mubr.bf16.mxu0 0
        %1603 = vmatmul.mubr.bf16.gmra.mrb[0].mxu0 %v1565
        %v1604 = vpop.f32.mrb[0].mxu0
        %v1605 = vadd.f32 %v1559, %v1604
        %v1606 = vpop.f32.mrb[0].mxu0
        %v1607 = vpop.f32.mrb[0].mxu0
        %v1608 = vpop.f32.mrb[0].mxu0
        %1609 = vdwg.mxu0
        %1610 = vxpose.xlu0.c.b16.start [1/8] %v1069, 128
        %1611 = vxpose.xlu0.c.b16.cont [2/8] 0, 128
        %1612 = vxpose.xlu0.c.b16.cont [3/8] 0, 128
        %1613 = vxpose.xlu0.c.b16.cont [4/8] 0, 128
        %1614 = vxpose.xlu0.c.b16.cont [5/8] 0, 128
        %1615 = vxpose.xlu0.c.b16.cont [6/8] 0, 128
        %1616 = vxpose.xlu0.c.b16.cont [7/8] 0, 128
        %1617 = vxpose.xlu0.c.b16.end [8/8] 0, 128
        %v1618 = vpop.trf.xlu0
        %v1619 = vpop.trf.xlu0
        %v1620 = vpop.trf.xlu0
        %v1621 = vpop.trf.xlu0
        %v1622 = vpop.trf.xlu0
        %v1623 = vpop.trf.xlu0
        %v1624 = vpop.trf.xlu0
        %v1625 = vpop.trf.xlu0
        %v1627 = vsel %vm1280, %v1618, 0
        %v1630 = vsel %vm1284, %v1166, 0
        %1632 = vmatprep.subr.bf16.mxu0 0
        %1633 = vmatpush1.bf16.msra.mxu0 %v1630
        %1634 = vmatprep.subr.bf16.mxu0 0
        %1635 = vmatpush1.bf16.msra.mxu0 0
        %1636 = vmatprep.subr.bf16.mxu0 0
        %1637 = vmatpush1.bf16.msra.mxu0 0
        %1638 = vmatprep.subr.bf16.mxu0 0
        %1639 = vmatpush1.bf16.msra.mxu0 0
        %1640 = vmatprep.subr.bf16.mxu0 0
        %1641 = vmatpush1.bf16.msra.mxu0 0
        %1642 = vmatprep.subr.bf16.mxu0 0
        %1643 = vmatpush1.bf16.msra.mxu0 0
        %1644 = vmatprep.subr.bf16.mxu0 0
        %1645 = vmatpush1.bf16.msra.mxu0 0
        %1646 = vmatprep.subr.bf16.mxu0 0
        %1647 = vmatpush1.bf16.msra.mxu0 0
        %1648 = vmatprep.subr.bf16.mxu0 0
        %1649 = vmatpush1.bf16.msra.mxu0 0
        %1650 = vmatprep.subr.bf16.mxu0 0
        %1651 = vmatpush1.bf16.msra.mxu0 0
        %1652 = vmatprep.subr.bf16.mxu0 0
        %1653 = vmatpush1.bf16.msra.mxu0 0
        %1654 = vmatprep.subr.bf16.mxu0 0
        %1655 = vmatpush1.bf16.msra.mxu0 0
        %1656 = vmatprep.subr.bf16.mxu0 0
        %1657 = vmatpush1.bf16.msra.mxu0 0
        %1658 = vmatprep.subr.bf16.mxu0 0
        %1659 = vmatpush1.bf16.msra.mxu0 0
        %1660 = vmatprep.subr.bf16.mxu0 0
        %1661 = vmatpush1.bf16.msra.mxu0 0
        %1662 = vmatprep.subr.bf16.mxu0 0
        %1663 = vmatpush1.bf16.msra.mxu0 0
        %1664 = vmatprep.mubr.bf16.mxu0 0
        %1665 = vmatmul.mubr.bf16.gmra.mrb[0].mxu0 %v1627
        %v1666 = vpop.f32.mrb[0].mxu0
        %v1667 = vadd.f32 0.0, %v1666
        %v1668 = vpop.f32.mrb[0].mxu0
        %v1669 = vpop.f32.mrb[0].mxu0
        %v1670 = vpop.f32.mrb[0].mxu0
        %1671 = vdwg.mxu0
        %v1672 = vsel %vm1280, %v1667, -inf
        %1673 = vmax.xlane.f32.xlu0 %v1672
        %v1674 = vpop.xlane.xlu0 %1673
        %v1675 = vsub.f32 %v1667, %v1674
        %v1676 = vmul.f32 %v1675, 1.442695
        %v1677 = vpow.pop %v1676
        %v1678 = vsel %vm1280, %v1677, 0.0
        %1679 = vadd.xlane.f32.xlu0 %v1678
        %v1680 = vpop.xlane.xlu0 %1679
        %v1681 = vrcp.pop %v1680
        %v1682 = vmul.f32 %v1677, %v1681
        %v1683 = vpack.c.bf16 %v1682, %v1682
        %v1685 = vsel %vm1280, %v1683, 0
        %v1688 = vsel %vm1280, %v1263, 0
        %1690 = vmatprep.subr.bf16.mxu0 0
        %1691 = vmatpush1.bf16.xpose.msra.mxu0 %v1688
        %1692 = vmatprep.subr.bf16.mxu0 0
        %1693 = vmatpush1.bf16.xpose.msra.mxu0 0
        %1694 = vmatprep.subr.bf16.mxu0 0
        %1695 = vmatpush1.bf16.xpose.msra.mxu0 0
        %1696 = vmatprep.subr.bf16.mxu0 0
        %1697 = vmatpush1.bf16.xpose.msra.mxu0 0
        %1698 = vmatprep.subr.bf16.mxu0 0
        %1699 = vmatpush1.bf16.xpose.msra.mxu0 0
        %1700 = vmatprep.subr.bf16.mxu0 0
        %1701 = vmatpush1.bf16.xpose.msra.mxu0 0
        %1702 = vmatprep.subr.bf16.mxu0 0
        %1703 = vmatpush1.bf16.xpose.msra.mxu0 0
        %1704 = vmatprep.subr.bf16.mxu0 0
        %1705 = vmatpush1.bf16.xpose.msra.mxu0 0
        %1706 = vmatprep.subr.bf16.mxu0 0
        %1707 = vmatpush1.bf16.xpose.msra.mxu0 0
        %1708 = vmatprep.subr.bf16.mxu0 0
        %1709 = vmatpush1.bf16.xpose.msra.mxu0 0
        %1710 = vmatprep.subr.bf16.mxu0 0
        %1711 = vmatpush1.bf16.xpose.msra.mxu0 0
        %1712 = vmatprep.subr.bf16.mxu0 0
        %1713 = vmatpush1.bf16.xpose.msra.mxu0 0
        %1714 = vmatprep.subr.bf16.mxu0 0
        %1715 = vmatpush1.bf16.xpose.msra.mxu0 0
        %1716 = vmatprep.subr.bf16.mxu0 0
        %1717 = vmatpush1.bf16.xpose.msra.mxu0 0
        %1718 = vmatprep.subr.bf16.mxu0 0
        %1719 = vmatpush1.bf16.xpose.msra.mxu0 0
        %1720 = vmatprep.subr.bf16.mxu0 0
        %1721 = vmatpush1.bf16.xpose.msra.mxu0 0
        %1722 = vmatprep.mubr.bf16.mxu0 0
        %1723 = vmatmul.mubr.bf16.gmra.mrb[0].mxu0 %v1685
        %v1724 = vpop.f32.mrb[0].mxu0
        %v1725 = vadd.f32 0.0, %v1724
        %v1726 = vpop.f32.mrb[0].mxu0
        %v1727 = vpop.f32.mrb[0].mxu0
        %v1728 = vpop.f32.mrb[0].mxu0
        %1729 = vdwg.mxu0
        %v1730 = vpack.c.bf16 %v1725, %v1725
        %s1731 = scalar_lea.vmem %s6, 8
        %v1732 = vld [vmem:[%s1731] sm:$0xf]
        %v1734 = vsel %vm1280, %v1730, 0
        %v1737 = vsel %vm1284, %v1732, 0
        %1739 = vmatprep.subr.bf16.mxu0 0
        %1740 = vmatpush1.bf16.msra.mxu0 %v1737
        %1741 = vmatprep.subr.bf16.mxu0 0
        %1742 = vmatpush1.bf16.msra.mxu0 0
        %1743 = vmatprep.subr.bf16.mxu0 0
        %1744 = vmatpush1.bf16.msra.mxu0 0
        %1745 = vmatprep.subr.bf16.mxu0 0
        %1746 = vmatpush1.bf16.msra.mxu0 0
        %1747 = vmatprep.subr.bf16.mxu0 0
        %1748 = vmatpush1.bf16.msra.mxu0 0
        %1749 = vmatprep.subr.bf16.mxu0 0
        %1750 = vmatpush1.bf16.msra.mxu0 0
        %1751 = vmatprep.subr.bf16.mxu0 0
        %1752 = vmatpush1.bf16.msra.mxu0 0
        %1753 = vmatprep.subr.bf16.mxu0 0
        %1754 = vmatpush1.bf16.msra.mxu0 0
        %1755 = vmatprep.subr.bf16.mxu0 0
        %1756 = vmatpush1.bf16.msra.mxu0 0
        %1757 = vmatprep.subr.bf16.mxu0 0
        %1758 = vmatpush1.bf16.msra.mxu0 0
        %1759 = vmatprep.subr.bf16.mxu0 0
        %1760 = vmatpush1.bf16.msra.mxu0 0
        %1761 = vmatprep.subr.bf16.mxu0 0
        %1762 = vmatpush1.bf16.msra.mxu0 0
        %1763 = vmatprep.subr.bf16.mxu0 0
        %1764 = vmatpush1.bf16.msra.mxu0 0
        %1765 = vmatprep.subr.bf16.mxu0 0
        %1766 = vmatpush1.bf16.msra.mxu0 0
        %1767 = vmatprep.subr.bf16.mxu0 0
        %1768 = vmatpush1.bf16.msra.mxu0 0
        %1769 = vmatprep.subr.bf16.mxu0 0
        %1770 = vmatpush1.bf16.msra.mxu0 0
        %1771 = vmatprep.mubr.bf16.mxu0 0
        %1772 = vmatmul.mubr.bf16.gmra.mrb[0].mxu0 %v1734
        %v1773 = vpop.f32.mrb[0].mxu0
        %v1774 = vadd.f32 0.0, %v1773
        %v1775 = vpop.f32.mrb[0].mxu0
        %v1776 = vpop.f32.mrb[0].mxu0
        %v1777 = vpop.f32.mrb[0].mxu0
        %1778 = vdwg.mxu0
        %v1779 = vadd.f32 %v1605, %v1774
        %v1781 = vrot.slane %v1069, 4
        %1783 = vxpose.xlu0.c.b16.start [1/8] %v1781, 128
        %1784 = vxpose.xlu0.c.b16.cont [2/8] 0, 128
        %1785 = vxpose.xlu0.c.b16.cont [3/8] 0, 128
        %1786 = vxpose.xlu0.c.b16.cont [4/8] 0, 128
        %1787 = vxpose.xlu0.c.b16.cont [5/8] 0, 128
        %1788 = vxpose.xlu0.c.b16.cont [6/8] 0, 128
        %1789 = vxpose.xlu0.c.b16.cont [7/8] 0, 128
        %1790 = vxpose.xlu0.c.b16.end [8/8] 0, 128
        %v1791 = vpop.trf.xlu0
        %v1792 = vpop.trf.xlu0
        %v1793 = vpop.trf.xlu0
        %v1794 = vpop.trf.xlu0
        %v1795 = vpop.trf.xlu0
        %v1796 = vpop.trf.xlu0
        %v1797 = vpop.trf.xlu0
        %v1798 = vpop.trf.xlu0
        %v1800 = vrot.slane %v1166, 4
        %v1802 = vsel %vm1280, %v1791, 0
        %v1805 = vsel %vm1284, %v1800, 0
        %1807 = vmatprep.subr.bf16.mxu0 0
        %1808 = vmatpush1.bf16.msra.mxu0 %v1805
        %1809 = vmatprep.subr.bf16.mxu0 0
        %1810 = vmatpush1.bf16.msra.mxu0 0
        %1811 = vmatprep.subr.bf16.mxu0 0
        %1812 = vmatpush1.bf16.msra.mxu0 0
        %1813 = vmatprep.subr.bf16.mxu0 0
        %1814 = vmatpush1.bf16.msra.mxu0 0
        %1815 = vmatprep.subr.bf16.mxu0 0
        %1816 = vmatpush1.bf16.msra.mxu0 0
        %1817 = vmatprep.subr.bf16.mxu0 0
        %1818 = vmatpush1.bf16.msra.mxu0 0
        %1819 = vmatprep.subr.bf16.mxu0 0
        %1820 = vmatpush1.bf16.msra.mxu0 0
        %1821 = vmatprep.subr.bf16.mxu0 0
        %1822 = vmatpush1.bf16.msra.mxu0 0
        %1823 = vmatprep.subr.bf16.mxu0 0
        %1824 = vmatpush1.bf16.msra.mxu0 0
        %1825 = vmatprep.subr.bf16.mxu0 0
        %1826 = vmatpush1.bf16.msra.mxu0 0
        %1827 = vmatprep.subr.bf16.mxu0 0
        %1828 = vmatpush1.bf16.msra.mxu0 0
        %1829 = vmatprep.subr.bf16.mxu0 0
        %1830 = vmatpush1.bf16.msra.mxu0 0
        %1831 = vmatprep.subr.bf16.mxu0 0
        %1832 = vmatpush1.bf16.msra.mxu0 0
        %1833 = vmatprep.subr.bf16.mxu0 0
        %1834 = vmatpush1.bf16.msra.mxu0 0
        %1835 = vmatprep.subr.bf16.mxu0 0
        %1836 = vmatpush1.bf16.msra.mxu0 0
        %1837 = vmatprep.subr.bf16.mxu0 0
        %1838 = vmatpush1.bf16.msra.mxu0 0
        %1839 = vmatprep.mubr.bf16.mxu0 0
        %1840 = vmatmul.mubr.bf16.gmra.mrb[0].mxu0 %v1802
        %v1841 = vpop.f32.mrb[0].mxu0
        %v1842 = vadd.f32 0.0, %v1841
        %v1843 = vpop.f32.mrb[0].mxu0
        %v1844 = vpop.f32.mrb[0].mxu0
        %v1845 = vpop.f32.mrb[0].mxu0
        %1846 = vdwg.mxu0
        %v1847 = vsel %vm1280, %v1842, -inf
        %1848 = vmax.xlane.f32.xlu0 %v1847
        %v1849 = vpop.xlane.xlu0 %1848
        %v1850 = vsub.f32 %v1842, %v1849
        %v1851 = vmul.f32 %v1850, 1.442695
        %v1852 = vpow.pop %v1851
        %v1853 = vsel %vm1280, %v1852, 0.0
        %1854 = vadd.xlane.f32.xlu0 %v1853
        %v1855 = vpop.xlane.xlu0 %1854
        %v1856 = vrcp.pop %v1855
        %v1857 = vmul.f32 %v1852, %v1856
        %v1858 = vpack.c.bf16 %v1857, %v1857
        %v1860 = vrot.slane %v1263, 4
        %v1862 = vsel %vm1280, %v1858, 0
        %v1865 = vsel %vm1280, %v1860, 0
        %1867 = vmatprep.subr.bf16.mxu0 0
        %1868 = vmatpush1.bf16.xpose.msra.mxu0 %v1865
        %1869 = vmatprep.subr.bf16.mxu0 0
        %1870 = vmatpush1.bf16.xpose.msra.mxu0 0
        %1871 = vmatprep.subr.bf16.mxu0 0
        %1872 = vmatpush1.bf16.xpose.msra.mxu0 0
        %1873 = vmatprep.subr.bf16.mxu0 0
        %1874 = vmatpush1.bf16.xpose.msra.mxu0 0
        %1875 = vmatprep.subr.bf16.mxu0 0
        %1876 = vmatpush1.bf16.xpose.msra.mxu0 0
        %1877 = vmatprep.subr.bf16.mxu0 0
        %1878 = vmatpush1.bf16.xpose.msra.mxu0 0
        %1879 = vmatprep.subr.bf16.mxu0 0
        %1880 = vmatpush1.bf16.xpose.msra.mxu0 0
        %1881 = vmatprep.subr.bf16.mxu0 0
        %1882 = vmatpush1.bf16.xpose.msra.mxu0 0
        %1883 = vmatprep.subr.bf16.mxu0 0
        %1884 = vmatpush1.bf16.xpose.msra.mxu0 0
        %1885 = vmatprep.subr.bf16.mxu0 0
        %1886 = vmatpush1.bf16.xpose.msra.mxu0 0
        %1887 = vmatprep.subr.bf16.mxu0 0
        %1888 = vmatpush1.bf16.xpose.msra.mxu0 0
        %1889 = vmatprep.subr.bf16.mxu0 0
        %1890 = vmatpush1.bf16.xpose.msra.mxu0 0
        %1891 = vmatprep.subr.bf16.mxu0 0
        %1892 = vmatpush1.bf16.xpose.msra.mxu0 0
        %1893 = vmatprep.subr.bf16.mxu0 0
        %1894 = vmatpush1.bf16.xpose.msra.mxu0 0
        %1895 = vmatprep.subr.bf16.mxu0 0
        %1896 = vmatpush1.bf16.xpose.msra.mxu0 0
        %1897 = vmatprep.subr.bf16.mxu0 0
        %1898 = vmatpush1.bf16.xpose.msra.mxu0 0
        %1899 = vmatprep.mubr.bf16.mxu0 0
        %1900 = vmatmul.mubr.bf16.gmra.mrb[0].mxu0 %v1862
        %v1901 = vpop.f32.mrb[0].mxu0
        %v1902 = vadd.f32 0.0, %v1901
        %v1903 = vpop.f32.mrb[0].mxu0
        %v1904 = vpop.f32.mrb[0].mxu0
        %v1905 = vpop.f32.mrb[0].mxu0
        %1906 = vdwg.mxu0
        %v1907 = vpack.c.bf16 %v1902, %v1902
        %s1908 = scalar_lea.vmem %s6, 12
        %v1909 = vld [vmem:[%s1908] sm:$0xf]
        %v1911 = vsel %vm1280, %v1907, 0
        %v1914 = vsel %vm1284, %v1909, 0
        %1916 = vmatprep.subr.bf16.mxu0 0
        %1917 = vmatpush1.bf16.msra.mxu0 %v1914
        %1918 = vmatprep.subr.bf16.mxu0 0
        %1919 = vmatpush1.bf16.msra.mxu0 0
        %1920 = vmatprep.subr.bf16.mxu0 0
        %1921 = vmatpush1.bf16.msra.mxu0 0
        %1922 = vmatprep.subr.bf16.mxu0 0
        %1923 = vmatpush1.bf16.msra.mxu0 0
        %1924 = vmatprep.subr.bf16.mxu0 0
        %1925 = vmatpush1.bf16.msra.mxu0 0
        %1926 = vmatprep.subr.bf16.mxu0 0
        %1927 = vmatpush1.bf16.msra.mxu0 0
        %1928 = vmatprep.subr.bf16.mxu0 0
        %1929 = vmatpush1.bf16.msra.mxu0 0
        %1930 = vmatprep.subr.bf16.mxu0 0
        %1931 = vmatpush1.bf16.msra.mxu0 0
        %1932 = vmatprep.subr.bf16.mxu0 0
        %1933 = vmatpush1.bf16.msra.mxu0 0
        %1934 = vmatprep.subr.bf16.mxu0 0
        %1935 = vmatpush1.bf16.msra.mxu0 0
        %1936 = vmatprep.subr.bf16.mxu0 0
        %1937 = vmatpush1.bf16.msra.mxu0 0
        %1938 = vmatprep.subr.bf16.mxu0 0
        %1939 = vmatpush1.bf16.msra.mxu0 0
        %1940 = vmatprep.subr.bf16.mxu0 0
        %1941 = vmatpush1.bf16.msra.mxu0 0
        %1942 = vmatprep.subr.bf16.mxu0 0
        %1943 = vmatpush1.bf16.msra.mxu0 0
        %1944 = vmatprep.subr.bf16.mxu0 0
        %1945 = vmatpush1.bf16.msra.mxu0 0
        %1946 = vmatprep.subr.bf16.mxu0 0
        %1947 = vmatpush1.bf16.msra.mxu0 0
        %1948 = vmatprep.mubr.bf16.mxu0 0
        %1949 = vmatmul.mubr.bf16.gmra.mrb[0].mxu0 %v1911
        %v1950 = vpop.f32.mrb[0].mxu0
        %v1951 = vadd.f32 0.0, %v1950
        %v1952 = vpop.f32.mrb[0].mxu0
        %v1953 = vpop.f32.mrb[0].mxu0
        %v1954 = vpop.f32.mrb[0].mxu0
        %1955 = vdwg.mxu0
        %v1956 = vadd.f32 %v1779, %v1951
        %v1957 = vld [vmem:[%s7] sm:$0x1]
        %v1959 = vlaneseq
        %v1960 = vshrl.u32 %v1959, 7
        %v1961 = vsub.s32 0, %v1960
        %v1962 = vrot.slane %v1957, %v1961
        %v1964 = vadd.f32 %v1956, %v1962
        %v1965 = vmul.f32 %v720, %v1964
        %v1966 = vadd.f32 %v518, %v1965
        %v1967 = vsel %vm551, %v1966, 0.0
        %1968 = vadd.xlane.f32.xlu0 %v1967
        %v1969 = vpop.xlane.xlu0 %1968
        %v1970 = vmul.f32 %v1969, %v923
        %v1971 = vsub.f32 %v1966, %v1970
        %v1972 = vmul.f32 %v1971, %v1971
        %v1973 = vsel %vm551, %v1972, 0.0
        %1974 = vadd.xlane.f32.xlu0 %v1973
        %v1975 = vpop.xlane.xlu0 %1974
        %v1976 = vmul.f32 %v1975, %v923
        %v1977 = vadd.f32 %v1976, 1e-06
        %v1978 = vrsqrt.pop %v1977
        %v1979 = vmul.f32 %v1971, %v1978
        %v1980 = vsel %vm551, %v1979, 0.0
        %1981 = vadd.xlane.f32.xlu0 %v1980
        %v1982 = vpop.xlane.xlu0 %1981
        %v1983 = vmul.f32 %v1982, %v923
        %v1984 = vsub.f32 %v1979, %v1983
        %v1985 = vmul.f32 %v1984, %v1984
        %v1986 = vsel %vm551, %v1985, 0.0
        %1987 = vadd.xlane.f32.xlu0 %v1986
        %v1988 = vpop.xlane.xlu0 %1987
        %v1989 = vmul.f32 %v1988, %v923
        %v1990 = vadd.f32 %v1989, 1e-06
        %v1991 = vrsqrt.pop %v1990
        %v1992 = vmul.f32 %v1984, %v1991
        %v1993 = vadd.f32 %v850, 1.0
        %v1994 = vmul.f32 %v1992, %v1993
        %v1995 = vadd.f32 %v1994, %v785
        %v1996 = vpack.c.bf16 %v1995, %v1995
        %v1997 = vld [vmem:[#allocation8] sm:$0xf]
        %v1998 = vld [vmem:[#allocation8 + $0x4] sm:$0xf]
        %v1999 = vld [vmem:[#allocation8 + $0x8] sm:$0xf]
        %v2000 = vld [vmem:[#allocation8 + $0xc] sm:$0xf]
        %v2001 = vld [vmem:[%s9] sm:$0x1]
        %v2003 = vlaneseq
        %v2004 = vshrl.u32 %v2003, 7
        %v2005 = vsub.s32 0, %v2004
        %v2006 = vrot.slane %v2001, %v2005
        %v2012 = vunpack.c.l.b16 %v1997
        %v2013 = vunpack.c.l.b16 %v1998
        %v2014 = vunpack.c.l.b16 %v1999
        %v2015 = vunpack.c.l.b16 %v2000
        %v2016 = vpack.c.b16 %v2013, %v2012
        %v2017 = vpack.c.b16 %v2015, %v2014
        %v2021 = vsel %vm551, %v1996, 0
        %2023 = vmatprep.subr.bf16.mxu0 0
        %2024 = vmatpush1.bf16.msra.mxu0 %v2016
        %2025 = vmatprep.subr.bf16.mxu0 0
        %2026 = vmatpush1.bf16.msra.mxu0 %v2017
        %2027 = vmatprep.subr.bf16.mxu0 0
        %2028 = vmatpush1.bf16.msra.mxu0 0
        %2029 = vmatprep.subr.bf16.mxu0 0
        %2030 = vmatpush1.bf16.msra.mxu0 0
        %2031 = vmatprep.subr.bf16.mxu0 0
        %2032 = vmatpush1.bf16.msra.mxu0 0
        %2033 = vmatprep.subr.bf16.mxu0 0
        %2034 = vmatpush1.bf16.msra.mxu0 0
        %2035 = vmatprep.subr.bf16.mxu0 0
        %2036 = vmatpush1.bf16.msra.mxu0 0
        %2037 = vmatprep.subr.bf16.mxu0 0
        %2038 = vmatpush1.bf16.msra.mxu0 0
        %2039 = vmatprep.subr.bf16.mxu0 0
        %2040 = vmatpush1.bf16.msra.mxu0 0
        %2041 = vmatprep.subr.bf16.mxu0 0
        %2042 = vmatpush1.bf16.msra.mxu0 0
        %2043 = vmatprep.subr.bf16.mxu0 0
        %2044 = vmatpush1.bf16.msra.mxu0 0
        %2045 = vmatprep.subr.bf16.mxu0 0
        %2046 = vmatpush1.bf16.msra.mxu0 0
        %2047 = vmatprep.subr.bf16.mxu0 0
        %2048 = vmatpush1.bf16.msra.mxu0 0
        %2049 = vmatprep.subr.bf16.mxu0 0
        %2050 = vmatpush1.bf16.msra.mxu0 0
        %2051 = vmatprep.subr.bf16.mxu0 0
        %2052 = vmatpush1.bf16.msra.mxu0 0
        %2053 = vmatprep.subr.bf16.mxu0 0
        %2054 = vmatpush1.bf16.msra.mxu0 0
        %2055 = vmatprep.mubr.bf16.mxu0 0
        %2056 = vmatmul.mubr.bf16.gmra.mrb[0].mxu0 %v2021
        %v2057 = vpop.f32.mrb[0].mxu0
        %v2058 = vadd.f32 %v2006, %v2057
        %v2059 = vpop.f32.mrb[0].mxu0
        %v2060 = vpop.f32.mrb[0].mxu0
        %v2061 = vpop.f32.mrb[0].mxu0
        %2062 = vdwg.mxu0
        %v2063 = vmax.f32 %v2058, 0.0
        %v2064 = vpack.c.bf16 %v2063, %v2063
        %v2065 = vld [vmem:[%s10] sm:$0xf]
        %v2066 = vld [vmem:[%s10 + $0x4] sm:$0xf]
        %v2067 = vld [vmem:[%s10 + $0x8] sm:$0xf]
        %v2068 = vld [vmem:[%s10 + $0xc] sm:$0xf]
        %v2069 = vld [vmem:[%s10 + $0x10] sm:$0xf]
        %v2070 = vld [vmem:[%s10 + $0x14] sm:$0xf]
        %v2071 = vld [vmem:[%s10 + $0x18] sm:$0xf]
        %v2072 = vld [vmem:[%s10 + $0x1c] sm:$0xf]
        %v2073 = vld [vmem:[%s11] sm:$0x1]
        %v2075 = vlaneseq
        %v2076 = vshrl.u32 %v2075, 7
        %v2077 = vsub.s32 0, %v2076
        %v2078 = vrot.slane %v2073, %v2077
        %v2088 = vunpack.c.l.b16 %v2065
        %v2089 = vunpack.c.l.b16 %v2066
        %v2090 = vunpack.c.l.b16 %v2067
        %v2091 = vunpack.c.l.b16 %v2068
        %v2092 = vunpack.c.l.b16 %v2069
        %v2093 = vunpack.c.l.b16 %v2070
        %v2094 = vunpack.c.l.b16 %v2071
        %v2095 = vunpack.c.l.b16 %v2072
        %v2096 = vpack.c.b16 %v2089, %v2088
        %v2097 = vpack.c.b16 %v2091, %v2090
        %v2098 = vpack.c.b16 %v2093, %v2092
        %v2099 = vpack.c.b16 %v2095, %v2094
        %vm2104 = vcmask 523264
        %v2106 = vsel %vm2104, %v2064, 0
        %2108 = vmatprep.subr.bf16.mxu0 0
        %2109 = vmatpush1.bf16.msra.mxu0 %v2096
        %2110 = vmatprep.subr.bf16.mxu0 0
        %2111 = vmatpush1.bf16.msra.mxu0 %v2097
        %2112 = vmatprep.subr.bf16.mxu0 0
        %2113 = vmatpush1.bf16.msra.mxu0 %v2098
        %2114 = vmatprep.subr.bf16.mxu0 0
        %2115 = vmatpush1.bf16.msra.mxu0 %v2099
        %2116 = vmatprep.subr.bf16.mxu0 0
        %2117 = vmatpush1.bf16.msra.mxu0 0
        %2118 = vmatprep.subr.bf16.mxu0 0
        %2119 = vmatpush1.bf16.msra.mxu0 0
        %2120 = vmatprep.subr.bf16.mxu0 0
        %2121 = vmatpush1.bf16.msra.mxu0 0
        %2122 = vmatprep.subr.bf16.mxu0 0
        %2123 = vmatpush1.bf16.msra.mxu0 0
        %2124 = vmatprep.subr.bf16.mxu0 0
        %2125 = vmatpush1.bf16.msra.mxu0 0
        %2126 = vmatprep.subr.bf16.mxu0 0
        %2127 = vmatpush1.bf16.msra.mxu0 0
        %2128 = vmatprep.subr.bf16.mxu0 0
        %2129 = vmatpush1.bf16.msra.mxu0 0
        %2130 = vmatprep.subr.bf16.mxu0 0
        %2131 = vmatpush1.bf16.msra.mxu0 0
        %2132 = vmatprep.subr.bf16.mxu0 0
        %2133 = vmatpush1.bf16.msra.mxu0 0
        %2134 = vmatprep.subr.bf16.mxu0 0
        %2135 = vmatpush1.bf16.msra.mxu0 0
        %2136 = vmatprep.subr.bf16.mxu0 0
        %2137 = vmatpush1.bf16.msra.mxu0 0
        %2138 = vmatprep.subr.bf16.mxu0 0
        %2139 = vmatpush1.bf16.msra.mxu0 0
        %2140 = vmatprep.mubr.bf16.mxu0 0
        %2141 = vmatmul.mubr.bf16.gmra.mrb[0].mxu0 %v2106
        %v2142 = vpop.f32.mrb[0].mxu0
        %v2143 = vadd.f32 %v2078, %v2142
        %v2144 = vpop.f32.mrb[0].mxu0
        %v2145 = vpop.f32.mrb[0].mxu0
        %v2146 = vpop.f32.mrb[0].mxu0
        %2147 = vdwg.mxu0
        %v2148 = vmul.f32 %v915, %v2143
        %v2149 = vadd.f32 %v1979, %v2148
        %v2150 = vsel %vm551, %v2149, 0.0
        %2151 = vadd.xlane.f32.xlu0 %v2150
        %v2152 = vpop.xlane.xlu0 %2151
        %v2153 = vmul.f32 %v2152, %v923
        %v2154 = vsub.f32 %v2149, %v2153
        %v2155 = vmul.f32 %v2154, %v2154
        %v2156 = vsel %vm551, %v2155, 0.0
        %2157 = vadd.xlane.f32.xlu0 %v2156
        %v2158 = vpop.xlane.xlu0 %2157
        %v2159 = vmul.f32 %v2158, %v923
        %v2160 = vadd.f32 %v2159, 1e-06
        %v2161 = vrsqrt.pop %v2160
        %v2162 = vmul.f32 %v2154, %v2161
        %2163 = vst.msk [vmem:[%s516] sm:$0xff] %vm551, %v2162
        %s2164 = sand.u32 %s321, 1
        %s2165 = scalar_lea.sflag [#allocation4], %s2164
        %s2166 = sand.u32 %s321, 1
        %s2167 = smul.addr %s2166, 8
        %s2168 = scalar_lea.vmem [#allocation10], %s2167
        // Predicated region
        $region85: #{tpu_custom_call.1} parent=67 // pred_check
          %p2169 = pneg %p331
        $region86: #{tpu_custom_call.1} parent=67 // pred_check_branch
          %2171 = sbr.rel (%p2169) target = $region88
        $region87: #{tpu_custom_call.1} parent=67 // pred_region
          %s2173 = ssub.s32 128, 128
          %2174 = vsyncadd %s2165, %s2173
          %s2175 = smul.addr %s37, 2
          %s2176 = sadd.s32 %s38, %s2175
          %s2177 = smul.addr %s2176, 128
          %s2178 = scalar_lea.hbm %s12, %s2177
          %s2180 = sshll.u32 %s2168, 4
          %s2181 = int_to_ptr.vmem [resolvable:$true] %s2180
          %2183 = dma.vmem_to_hbm [thread:$0]  %s2181, 128, %s2178, %s2165
        $region88: #{tpu_custom_call.1} parent=67 // pred_fallthru
          _
      $region68: #{tpu_custom_call.1} parent=5 // pred_fallthru
        _
      %p2184 = scmp.le.s32.totalorder 2, %s28
      // Predicated region
      $region89: #{tpu_custom_call.1} parent=5 // pred_check
        %p2185 = pneg %p2184
      $region90: #{tpu_custom_call.1} parent=5 // pred_check_branch
        %2187 = sbr.rel (%p2185) target = $region92
      $region91: #{tpu_custom_call.1} parent=5 // pred_region
        %s2188 = ssub.s32 %s28, 2
        // Predicated region
        $region93: #{tpu_custom_call.1} parent=91 // pred_check
          %p2189 = pneg %p337
        $region94: #{tpu_custom_call.1} parent=91 // pred_check_branch
          %2191 = sbr.rel (%p2189) target = $region96
        $region95: #{tpu_custom_call.1} parent=91 // pred_region
          %s2192 = sand.u32 %s322, 1
          %s2193 = scalar_lea.sflag [#allocation4], %s2192
          %s2194 = sand.u32 %s322, 1
          %s2195 = smul.addr %s2194, 8
          %s2196 = scalar_lea.vmem [#allocation10], %s2195
          %2197 = dma.done %s2193, 128
        $region96: #{tpu_custom_call.1} parent=91 // pred_fallthru
          _
      $region92: #{tpu_custom_call.1} parent=5 // pred_fallthru
        _
    $region6: #{tpu_custom_call.1} parent=1 // loop_footer
      %s32 = sadd.s32 1, %s28
    $region7: #{tpu_custom_call.1} parent=1 // loop_footer_branch
      %27 = sbr.rel target = $region3
    $region8: #{tpu_custom_call.1} parent=1 // loop_exit
      _
    %2198 = vsyncpa [#allocation3], 1
    %s2199 = scalar_lea.sflag [#allocation3], 1
    %2200 = vsyncpa %s2199, 1
    %2201 = vsyncpa [#allocation6], 1
    %s2202 = scalar_lea.sflag [#allocation6], 1
    %2203 = vsyncpa %s2202, 1
    %2204 = vsyncpa [#allocation9], 1
    %2205 = vsyncpa [#allocation4], 1
    %s2206 = scalar_lea.sflag [#allocation4], 1
    %2207 = vsyncpa %s2206, 1

</llo_original>
